<compile_context>
chip_gen: v7x
topology: tpu7x:2x2x1
jax: 0.10.0
libtpu: 0.0.40
codegen_flags: <defaults>
</compile_context>

<pallas_src>
import functools

import jax
import jax.numpy as jnp
from jax import lax
from jax.experimental import pallas as pl
from jax.experimental.pallas import tpu as pltpu


# ----------------------------- quantization helpers ---------------------------

def _quantize_k(x, k):
    n = float(2 ** k - 1)
    return jnp.round(x * n) / n


def _qrelu(x, k):
    # DoReFa activation quantization: clip to [0,1], k-bit uniform quantize.
    # Kept in f32 (no bf16 elementwise -> also fine on v5e).
    return _quantize_k(jnp.clip(x, 0.0, 1.0), k)


def dorefa_weight(w, bitW):
    if bitW >= 32:
        return w
    wt = jnp.tanh(w)
    wn = wt / (2.0 * jnp.max(jnp.abs(wt))) + 0.5
    return 2.0 * _quantize_k(wn, bitW) - 1.0


def fold_bn(gamma, beta, mean, var, eps=1e-5):
    scale = gamma / jnp.sqrt(var + eps)
    return scale, beta - mean * scale


# ------------------------------- fused kernel ---------------------------------

def _bottleneck_kernel(x_ref, boost_ref, mask_ref,
                       w1_ref, s1_ref, b1_ref,
                       w2_ref, s2_ref, b2_ref,
                       w3_ref, s3_ref, b3_ref,
                       aw_ref, sa_ref, ba_ref,
                       out_ref, bout_ref,
                       *, H, W, bitA, is_last):
    HW = H * W
    bf16 = jnp.bfloat16
    f32 = jnp.float32

    x = x_ref[...]                                        # (C4, HW) f32

    # ---- conv1 (1x1) + bn1 + QReLU:  (P, C4) @ (C4, HW) ----
    y1 = jnp.dot(w1_ref[...], x.astype(bf16), preferred_element_type=f32)
    a1 = _qrelu(y1 * s1_ref[...] + b1_ref[...], bitA)     # (P, HW) f32

    # ---- conv2 (3x3, pad=1, stride=1) + bn2 + QReLU ----
    # Tap (dy, dx) needs input pixel p + (dy-1)*W + (dx-1): implemented as a
    # lane roll of the flattened H*W axis plus a precomputed validity mask
    # (zero padding handled here, no strided slices / relayouts).
    P = a1.shape[0]
    acc = jnp.zeros((P, HW), f32)
    for dy in range(3):
        for dx in range(3):
            k = dy * 3 + dx
            off = (dy - 1) * W + (dx - 1)
            if off == 0:
                tap = a1                                  # center tap, no shift
            else:
                tap = pltpu.roll(a1, shift=(-off) % HW, axis=1)
                tap = tap * mask_ref[k]                   # zero out-of-image pixels
            acc = acc + jnp.dot(w2_ref[k], tap.astype(bf16),
                                preferred_element_type=f32)
    a2 = _qrelu(acc * s2_ref[...] + b2_ref[...], bitA)    # (P, HW) f32

    # ---- conv3 (1x1) + bn3:  (C4, P) @ (P, HW) ----
    y3 = jnp.dot(w3_ref[...], a2.astype(bf16), preferred_element_type=f32)
    y3 = y3 * s3_ref[...] + b3_ref[...]

    # ---- residual add (downsample=None -> identity residual) ----
    o = y3 + x                                            # (C4, HW) f32

    # ---- auxiliary 1x1 conv + bn on the pre-activation sum, booster ReLU ----
    aux = jnp.dot(aw_ref[...], o.astype(bf16), preferred_element_type=f32)
    aux = aux * sa_ref[...] + ba_ref[...]
    bout_ref[...] = jnp.maximum(boost_ref[...] + aux, 0.0)

    # ---- final activation on the main path ----
    if is_last:
        out_ref[...] = jnp.maximum(o, 0.0)
    else:
        out_ref[...] = _qrelu(o, bitA)


# ------------------------------- forward wrapper -------------------------------

@functools.partial(jax.jit, static_argnames=("bitW", "bitA", "stride", "is_last"))
def bottleneck_forward(x, booster, params, *, bitW, bitA, stride=1, is_last=False):
    """Fused Bottleneck.forward (downsample=None).  x, booster: NCHW float32."""
    N, C, H, W = x.shape
    planes = params["w1"].shape[0]
    c4 = planes * 4
    assert stride == 1 and C == c4, "downsample=None path requires identity shape"
    HW = H * W
    assert HW % 128 == 0 and c4 % 8 == 0, "H*W must be lane-aligned, 4*planes sublane-aligned"

    bf16 = jnp.bfloat16
    f32 = jnp.float32

    # --- parameter preprocessing: DoReFa weight quant, BN fold, bf16 cast (once) ---
    w1 = dorefa_weight(params["w1"], bitW).astype(bf16)                      # (P, C4)
    w2 = jnp.transpose(dorefa_weight(params["w2"], bitW), (2, 3, 0, 1))      # (3,3,P,P)
    w2 = w2.reshape(9, planes, planes).astype(bf16)                          # tap-major
    w3 = dorefa_weight(params["w3"], bitW).astype(bf16)                      # (C4, P)
    aw = params["aux_w"].astype(bf16)                                        # (C4, C4)

    s1, b1 = fold_bn(*params["bn1"])
    s2, b2 = fold_bn(*params["bn2"])
    s3, b3 = fold_bn(*params["bn3"])
    sa, ba = fold_bn(*params["bn_aux"])
    s1, b1 = s1.reshape(planes, 1), b1.reshape(planes, 1)
    s2, b2 = s2.reshape(planes, 1), b2.reshape(planes, 1)
    s3, b3 = s3.reshape(c4, 1), b3.reshape(c4, 1)
    sa, ba = sa.reshape(c4, 1), ba.reshape(c4, 1)

    # --- per-tap validity masks for the in-kernel 3x3 zero padding (built once) ---
    pix = jnp.arange(HW, dtype=jnp.int32)
    row, col = pix // W, pix % W
    masks = []
    for dy in range(3):
        for dx in range(3):
            r, c = row + dy - 1, col + dx - 1
            masks.append((r >= 0) & (r < H) & (c >= 0) & (c < W))
    tap_mask = jnp.stack(masks).astype(f32).reshape(9, 1, HW)

    # --- NCHW -> (N, C, H*W): free reshape, no transpose ---
    x3 = x.reshape(N, c4, HW)
    bo3 = booster.reshape(N, c4, HW)

    kern = functools.partial(_bottleneck_kernel, H=H, W=W, bitA=bitA,
                             is_last=is_last)

    batch_map = lambda n: (n, 0, 0)
    const2 = lambda n: (0, 0)
    const3 = lambda n: (0, 0, 0)

    out, boost = pl.pallas_call(
        kern,
        out_shape=(jax.ShapeDtypeStruct((N, c4, HW), f32),
                   jax.ShapeDtypeStruct((N, c4, HW), f32)),
        grid=(N,),
        in_specs=[
            pl.BlockSpec((None, c4, HW), batch_map),       # x (per-image block)
            pl.BlockSpec((None, c4, HW), batch_map),       # booster
            pl.BlockSpec((9, 1, HW), const3),              # 3x3 boundary masks (resident)
            pl.BlockSpec((planes, c4), const2),            # w1 (resident)
            pl.BlockSpec((planes, 1), const2),             # bn1 scale
            pl.BlockSpec((planes, 1), const2),             # bn1 bias
            pl.BlockSpec((9, planes, planes), const3),     # w2 taps (resident)
            pl.BlockSpec((planes, 1), const2),             # bn2 scale
            pl.BlockSpec((planes, 1), const2),             # bn2 bias
            pl.BlockSpec((c4, planes), const2),            # w3 (resident)
            pl.BlockSpec((c4, 1), const2),                 # bn3 scale
            pl.BlockSpec((c4, 1), const2),                 # bn3 bias
            pl.BlockSpec((c4, c4), const2),                # auxiliary conv weight
            pl.BlockSpec((c4, 1), const2),                 # aux bn scale
            pl.BlockSpec((c4, 1), const2),                 # aux bn bias
        ],
        out_specs=(pl.BlockSpec((None, c4, HW), batch_map),
                   pl.BlockSpec((None, c4, HW), batch_map)),
        compiler_params=pltpu.CompilerParams(
            dimension_semantics=("parallel",),             # batch -> both TCs on v7x
            vmem_limit_bytes=32 * 1024 * 1024),            # explicit, safe on v5e..v7x
    )(x3, bo3, tap_mask, w1, s1, b1, w2, s2, b2, w3, s3, b3, aw, sa, ba)

    return out.reshape(N, c4, H, W), boost.reshape(N, c4, H, W)


# --------------------------- pure-JAX reference (no Pallas) --------------------

def reference_forward(x, booster, params, *, bitW, bitA, is_last=False):
    """Mirrors the PyTorch Bottleneck.forward math (same bf16 MXU operands)."""
    bf16 = jnp.bfloat16
    f32 = jnp.float32
    w1 = dorefa_weight(params["w1"], bitW)
    w2 = dorefa_weight(params["w2"], bitW)
    w3 = dorefa_weight(params["w3"], bitW)
    aw = params["aux_w"]
    s1, b1 = fold_bn(*params["bn1"])
    s2, b2 = fold_bn(*params["bn2"])
    s3, b3 = fold_bn(*params["bn3"])
    sa, ba = fold_bn(*params["bn_aux"])

    def bn(y, s, b):
        return y * s[None, :, None, None] + b[None, :, None, None]

    def conv1x1(t, w):
        return jnp.einsum("oi,nihw->nohw", w.astype(bf16), t.astype(bf16),
                          preferred_element_type=f32)

    out = _qrelu(bn(conv1x1(x, w1), s1, b1), bitA)
    out = lax.conv_general_dilated(
        out.astype(bf16), w2.astype(bf16), window_strides=(1, 1),
        padding=((1, 1), (1, 1)), dimension_numbers=("NCHW", "OIHW", "NCHW"),
        preferred_element_type=f32)
    out = _qrelu(bn(out, s2, b2), bitA)
    out = bn(conv1x1(out, w3), s3, b3)
    out = out + x                                   # identity residual
    aux = bn(conv1x1(out, aw), sa, ba)
    booster = jnp.maximum(booster + aux, 0.0)
    out = jnp.maximum(out, 0.0) if is_last else _qrelu(out, bitA)
    return out, booster


# ----------------------------- parameter construction --------------------------

def init_bn(key, c):
    k1, k2, k3, k4 = jax.random.split(key, 4)
    gamma = 1.0 + 0.1 * jax.random.normal(k1, (c,), jnp.float32)
    beta = 0.1 * jax.random.normal(k2, (c,), jnp.float32)
    mean = 0.1 * jax.random.normal(k3, (c,), jnp.float32)
    var = jax.random.uniform(k4, (c,), jnp.float32, minval=0.5, maxval=1.5)
    return gamma, beta, mean, var


def make_params(key, inplanes, planes):
    c4 = planes * 4
    ks = jax.random.split(key, 8)
    # Conv weights stored in PyTorch OI(HW) layout.
    return {
        "w1": 0.1 * jax.random.normal(ks[0], (planes, inplanes), jnp.float32),
        "w2": 0.1 * jax.random.normal(ks[1], (planes, planes, 3, 3), jnp.float32),
        "w3": 0.1 * jax.random.normal(ks[2], (c4, planes), jnp.float32),
        "aux_w": 0.1 * jax.random.normal(ks[3], (c4, c4), jnp.float32),
        "bn1": init_bn(ks[4], planes),
        "bn2": init_bn(ks[5], planes),
        "bn3": init_bn(ks[6], c4),
        "bn_aux": init_bn(ks[7], c4),
    }


# ------------------------------------ main -------------------------------------

if __name__ == "__main__":
    key = jax.random.PRNGKey(0)
    k_x, k_b, k_p = jax.random.split(key, 3)

    inplanes, planes = 16, 4        # expansion=4 -> identity residual needs inplanes == 4*planes
    N, H, W = 2, 16, 16
    bitW, bitA = 4, 4

    x = jax.random.normal(k_x, (N, inplanes, H, W), jnp.float32)
    booster = jax.random.normal(k_b, (N, planes * 4, H, W), jnp.float32)
    params = make_params(k_p, inplanes, planes)

    out, boost = bottleneck_forward(x, booster, params, bitW=bitW, bitA=bitA,
                                    stride=1, is_last=False)
    out = jax.block_until_ready(out)
    boost = jax.block_until_ready(boost)

    # shape / range sanity
    assert out.shape == (N, planes * 4, H, W), out.shape
    assert boost.shape == (N, planes * 4, H, W), boost.shape
    assert bool(jnp.all(jnp.isfinite(out))) and bool(jnp.all(jnp.isfinite(boost)))
    assert float(jnp.min(out)) >= 0.0 and float(jnp.max(out)) <= 1.0  # QReLU range
    assert float(jnp.min(boost)) >= 0.0                               # plain ReLU

    # numerical check against the pure-JAX reference of the same forward pass.
    ref_out, ref_boost = reference_forward(x, booster, params, bitW=bitW,
                                           bitA=bitA, is_last=False)
    ref_out = jax.block_until_ready(ref_out)
    # Mean-abs tolerance: allows the rare k-bit rounding-boundary flip caused by
    # bf16 accumulation-order differences, but catches any structural error.
    assert float(jnp.mean(jnp.abs(out - ref_out))) < 5e-3
    assert float(jnp.mean(jnp.abs(boost - ref_boost))) < 5e-3

    print("KERNEL_OK")
</pallas_src>

<mosaic_0001>
module attributes {stable_mosaic.version = 11 : i64} {
  func.func @_bottleneck_kernel(%arg0: i32, %arg1: memref<1x16x256xf32, #tpu.memory_space<vmem>>, %arg2: memref<1x16x256xf32, #tpu.memory_space<vmem>>, %arg3: memref<9x1x256xf32, #tpu.memory_space<vmem>>, %arg4: memref<4x16xbf16, #tpu.memory_space<vmem>>, %arg5: memref<4x1xf32, #tpu.memory_space<vmem>>, %arg6: memref<4x1xf32, #tpu.memory_space<vmem>>, %arg7: memref<9x4x4xbf16, #tpu.memory_space<vmem>>, %arg8: memref<4x1xf32, #tpu.memory_space<vmem>>, %arg9: memref<4x1xf32, #tpu.memory_space<vmem>>, %arg10: memref<16x4xbf16, #tpu.memory_space<vmem>>, %arg11: memref<16x1xf32, #tpu.memory_space<vmem>>, %arg12: memref<16x1xf32, #tpu.memory_space<vmem>>, %arg13: memref<16x16xbf16, #tpu.memory_space<vmem>>, %arg14: memref<16x1xf32, #tpu.memory_space<vmem>>, %arg15: memref<16x1xf32, #tpu.memory_space<vmem>>, %arg16: memref<1x16x256xf32, #tpu.memory_space<vmem>>, %arg17: memref<1x16x256xf32, #tpu.memory_space<vmem>>) attributes {dimension_semantics = [#tpu.dimension_semantics<parallel>], iteration_bounds = array<i64: 2>, scalar_prefetch = 0 : i64, scratch_operands = 0 : i64, tpu.core_type = #tpu.core_type<tc>, window_params = [{transform_indices = @transform_0, window_bounds = array<i64: 1, 16, 256>}, {transform_indices = @transform_1, window_bounds = array<i64: 1, 16, 256>}, {pipeline_mode = #tpu.pipeline_mode<synchronous>, transform_indices = @transform_2, window_bounds = array<i64: 9, 1, 256>}, {pipeline_mode = #tpu.pipeline_mode<synchronous>, transform_indices = @transform_3, window_bounds = array<i64: 4, 16>}, {pipeline_mode = #tpu.pipeline_mode<synchronous>, transform_indices = @transform_4, window_bounds = array<i64: 4, 1>}, {pipeline_mode = #tpu.pipeline_mode<synchronous>, transform_indices = @transform_5, window_bounds = array<i64: 4, 1>}, {pipeline_mode = #tpu.pipeline_mode<synchronous>, transform_indices = @transform_6, window_bounds = array<i64: 9, 4, 4>}, {pipeline_mode = #tpu.pipeline_mode<synchronous>, transform_indices = @transform_7, window_bounds = array<i64: 4, 1>}, {pipeline_mode = #tpu.pipeline_mode<synchronous>, transform_indices = @transform_8, window_bounds = array<i64: 4, 1>}, {pipeline_mode = #tpu.pipeline_mode<synchronous>, transform_indices = @transform_9, window_bounds = array<i64: 16, 4>}, {pipeline_mode = #tpu.pipeline_mode<synchronous>, transform_indices = @transform_10, window_bounds = array<i64: 16, 1>}, {pipeline_mode = #tpu.pipeline_mode<synchronous>, transform_indices = @transform_11, window_bounds = array<i64: 16, 1>}, {pipeline_mode = #tpu.pipeline_mode<synchronous>, transform_indices = @transform_12, window_bounds = array<i64: 16, 16>}, {pipeline_mode = #tpu.pipeline_mode<synchronous>, transform_indices = @transform_13, window_bounds = array<i64: 16, 1>}, {pipeline_mode = #tpu.pipeline_mode<synchronous>, transform_indices = @transform_14, window_bounds = array<i64: 16, 1>}, {transform_indices = @transform_15, window_bounds = array<i64: 1, 16, 256>}, {transform_indices = @transform_16, window_bounds = array<i64: 1, 16, 256>}]} {
    %c0 = arith.constant 0 : index
    %c0_0 = arith.constant 0 : index
    %c0_1 = arith.constant 0 : index
    %0 = vector.load %arg1[%c0, %c0_0, %c0_1] : memref<1x16x256xf32, #tpu.memory_space<vmem>>, vector<1x16x256xf32>
    %1 = vector.shape_cast %0 : vector<1x16x256xf32> to vector<16x256xf32>
    %c0_2 = arith.constant 0 : index
    %c0_3 = arith.constant 0 : index
    %2 = vector.load %arg4[%c0_2, %c0_3] : memref<4x16xbf16, #tpu.memory_space<vmem>>, vector<4x16xbf16>
    %3 = arith.truncf %1 : vector<16x256xf32> to vector<16x256xbf16>
    %cst = arith.constant dense<0.000000e+00> : vector<4x256xf32>
    %4 = tpu.matmul %2, %3, %cst {dimension_numbers = #tpu.dot_dimension_numbers<[1], [0], [0], [1], [0, 0, 1, 1], [], []>} : vector<4x16xbf16>, vector<16x256xbf16>, vector<4x256xf32> -> vector<4x256xf32>
    %c0_4 = arith.constant 0 : index
    %c0_5 = arith.constant 0 : index
    %5 = vector.load %arg5[%c0_4, %c0_5] : memref<4x1xf32, #tpu.memory_space<vmem>>, vector<4x1xf32>
    %6 = vector.broadcast %5 : vector<4x1xf32> to vector<4x256xf32>
    %7 = arith.mulf %4, %6 : vector<4x256xf32>
    %c0_6 = arith.constant 0 : index
    %c0_7 = arith.constant 0 : index
    %8 = vector.load %arg6[%c0_6, %c0_7] : memref<4x1xf32, #tpu.memory_space<vmem>>, vector<4x1xf32>
    %9 = vector.broadcast %8 : vector<4x1xf32> to vector<4x256xf32>
    %10 = arith.addf %7, %9 : vector<4x256xf32>
    %cst_8 = arith.constant 0.000000e+00 : f32
    %cst_9 = arith.constant 1.000000e+00 : f32
    %11 = vector.broadcast %cst_8 : f32 to vector<4x256xf32>
    %12 = arith.maximumf %11, %10 : vector<4x256xf32>
    %13 = vector.broadcast %cst_9 : f32 to vector<4x256xf32>
    %14 = arith.minimumf %13, %12 : vector<4x256xf32>
    %cst_10 = arith.constant 1.500000e+01 : f32
    %15 = vector.broadcast %cst_10 : f32 to vector<4x256xf32>
    %16 = arith.mulf %14, %15 : vector<4x256xf32>
    %17 = math.roundeven %16 : vector<4x256xf32>
    %cst_11 = arith.constant 1.500000e+01 : f32
    %18 = vector.broadcast %cst_11 : f32 to vector<4x256xf32>
    %19 = arith.divf %17, %18 : vector<4x256xf32>
    %cst_12 = arith.constant 0.000000e+00 : f32
    %20 = vector.broadcast %cst_12 : f32 to vector<4x256xf32>
    %c17_i32 = arith.constant 17 : i32
    %21 = tpu.dynamic_rotate %19 by %c17_i32 dim 1 : vector<4x256xf32>, i32 -> vector<4x256xf32>
    %c0_13 = arith.constant 0 : index
    %c0_14 = arith.constant 0 : index
    %c0_15 = arith.constant 0 : index
    %22 = vector.load %arg3[%c0_13, %c0_14, %c0_15] : memref<9x1x256xf32, #tpu.memory_space<vmem>>, vector<1x1x256xf32>
    %23 = vector.shape_cast %22 : vector<1x1x256xf32> to vector<1x256xf32>
    %24 = vector.broadcast %23 : vector<1x256xf32> to vector<4x256xf32>
    %25 = arith.mulf %21, %24 : vector<4x256xf32>
    %c0_16 = arith.constant 0 : index
    %c0_17 = arith.constant 0 : index
    %c0_18 = arith.constant 0 : index
    %26 = vector.load %arg7[%c0_16, %c0_17, %c0_18] : memref<9x4x4xbf16, #tpu.memory_space<vmem>>, vector<1x4x4xbf16>
    %27 = vector.shape_cast %26 : vector<1x4x4xbf16> to vector<4x4xbf16>
    %28 = arith.truncf %25 : vector<4x256xf32> to vector<4x256xbf16>
    %cst_19 = arith.constant dense<0.000000e+00> : vector<4x256xf32>
    %29 = tpu.matmul %27, %28, %cst_19 {dimension_numbers = #tpu.dot_dimension_numbers<[1], [0], [0], [1], [0, 0, 1, 1], [], []>} : vector<4x4xbf16>, vector<4x256xbf16>, vector<4x256xf32> -> vector<4x256xf32>
    %30 = arith.addf %20, %29 : vector<4x256xf32>
    %c16_i32 = arith.constant 16 : i32
    %31 = tpu.dynamic_rotate %19 by %c16_i32 dim 1 : vector<4x256xf32>, i32 -> vector<4x256xf32>
    %c1 = arith.constant 1 : index
    %c0_20 = arith.constant 0 : index
    %c0_21 = arith.constant 0 : index
    %32 = vector.load %arg3[%c1, %c0_20, %c0_21] : memref<9x1x256xf32, #tpu.memory_space<vmem>>, vector<1x1x256xf32>
    %33 = vector.shape_cast %32 : vector<1x1x256xf32> to vector<1x256xf32>
    %34 = vector.broadcast %33 : vector<1x256xf32> to vector<4x256xf32>
    %35 = arith.mulf %31, %34 : vector<4x256xf32>
    %c1_22 = arith.constant 1 : index
    %c0_23 = arith.constant 0 : index
    %c0_24 = arith.constant 0 : index
    %36 = vector.load %arg7[%c1_22, %c0_23, %c0_24] : memref<9x4x4xbf16, #tpu.memory_space<vmem>>, vector<1x4x4xbf16>
    %37 = vector.shape_cast %36 : vector<1x4x4xbf16> to vector<4x4xbf16>
    %38 = arith.truncf %35 : vector<4x256xf32> to vector<4x256xbf16>
    %cst_25 = arith.constant dense<0.000000e+00> : vector<4x256xf32>
    %39 = tpu.matmul %37, %38, %cst_25 {dimension_numbers = #tpu.dot_dimension_numbers<[1], [0], [0], [1], [0, 0, 1, 1], [], []>} : vector<4x4xbf16>, vector<4x256xbf16>, vector<4x256xf32> -> vector<4x256xf32>
    %40 = arith.addf %30, %39 : vector<4x256xf32>
    %c15_i32 = arith.constant 15 : i32
    %41 = tpu.dynamic_rotate %19 by %c15_i32 dim 1 : vector<4x256xf32>, i32 -> vector<4x256xf32>
    %c2 = arith.constant 2 : index
    %c0_26 = arith.constant 0 : index
    %c0_27 = arith.constant 0 : index
    %42 = vector.load %arg3[%c2, %c0_26, %c0_27] : memref<9x1x256xf32, #tpu.memory_space<vmem>>, vector<1x1x256xf32>
    %43 = vector.shape_cast %42 : vector<1x1x256xf32> to vector<1x256xf32>
    %44 = vector.broadcast %43 : vector<1x256xf32> to vector<4x256xf32>
    %45 = arith.mulf %41, %44 : vector<4x256xf32>
    %c2_28 = arith.constant 2 : index
    %c0_29 = arith.constant 0 : index
    %c0_30 = arith.constant 0 : index
    %46 = vector.load %arg7[%c2_28, %c0_29, %c0_30] : memref<9x4x4xbf16, #tpu.memory_space<vmem>>, vector<1x4x4xbf16>
    %47 = vector.shape_cast %46 : vector<1x4x4xbf16> to vector<4x4xbf16>
    %48 = arith.truncf %45 : vector<4x256xf32> to vector<4x256xbf16>
    %cst_31 = arith.constant dense<0.000000e+00> : vector<4x256xf32>
    %49 = tpu.matmul %47, %48, %cst_31 {dimension_numbers = #tpu.dot_dimension_numbers<[1], [0], [0], [1], [0, 0, 1, 1], [], []>} : vector<4x4xbf16>, vector<4x256xbf16>, vector<4x256xf32> -> vector<4x256xf32>
    %50 = arith.addf %40, %49 : vector<4x256xf32>
    %c1_i32 = arith.constant 1 : i32
    %51 = tpu.dynamic_rotate %19 by %c1_i32 dim 1 : vector<4x256xf32>, i32 -> vector<4x256xf32>
    %c3 = arith.constant 3 : index
    %c0_32 = arith.constant 0 : index
    %c0_33 = arith.constant 0 : index
    %52 = vector.load %arg3[%c3, %c0_32, %c0_33] : memref<9x1x256xf32, #tpu.memory_space<vmem>>, vector<1x1x256xf32>
    %53 = vector.shape_cast %52 : vector<1x1x256xf32> to vector<1x256xf32>
    %54 = vector.broadcast %53 : vector<1x256xf32> to vector<4x256xf32>
    %55 = arith.mulf %51, %54 : vector<4x256xf32>
    %c3_34 = arith.constant 3 : index
    %c0_35 = arith.constant 0 : index
    %c0_36 = arith.constant 0 : index
    %56 = vector.load %arg7[%c3_34, %c0_35, %c0_36] : memref<9x4x4xbf16, #tpu.memory_space<vmem>>, vector<1x4x4xbf16>
    %57 = vector.shape_cast %56 : vector<1x4x4xbf16> to vector<4x4xbf16>
    %58 = arith.truncf %55 : vector<4x256xf32> to vector<4x256xbf16>
    %cst_37 = arith.constant dense<0.000000e+00> : vector<4x256xf32>
    %59 = tpu.matmul %57, %58, %cst_37 {dimension_numbers = #tpu.dot_dimension_numbers<[1], [0], [0], [1], [0, 0, 1, 1], [], []>} : vector<4x4xbf16>, vector<4x256xbf16>, vector<4x256xf32> -> vector<4x256xf32>
    %60 = arith.addf %50, %59 : vector<4x256xf32>
    %c4 = arith.constant 4 : index
    %c0_38 = arith.constant 0 : index
    %c0_39 = arith.constant 0 : index
    %61 = vector.load %arg7[%c4, %c0_38, %c0_39] : memref<9x4x4xbf16, #tpu.memory_space<vmem>>, vector<1x4x4xbf16>
    %62 = vector.shape_cast %61 : vector<1x4x4xbf16> to vector<4x4xbf16>
    %63 = arith.truncf %19 : vector<4x256xf32> to vector<4x256xbf16>
    %cst_40 = arith.constant dense<0.000000e+00> : vector<4x256xf32>
    %64 = tpu.matmul %62, %63, %cst_40 {dimension_numbers = #tpu.dot_dimension_numbers<[1], [0], [0], [1], [0, 0, 1, 1], [], []>} : vector<4x4xbf16>, vector<4x256xbf16>, vector<4x256xf32> -> vector<4x256xf32>
    %65 = arith.addf %60, %64 : vector<4x256xf32>
    %c255_i32 = arith.constant 255 : i32
    %66 = tpu.dynamic_rotate %19 by %c255_i32 dim 1 : vector<4x256xf32>, i32 -> vector<4x256xf32>
    %c5 = arith.constant 5 : index
    %c0_41 = arith.constant 0 : index
    %c0_42 = arith.constant 0 : index
    %67 = vector.load %arg3[%c5, %c0_41, %c0_42] : memref<9x1x256xf32, #tpu.memory_space<vmem>>, vector<1x1x256xf32>
    %68 = vector.shape_cast %67 : vector<1x1x256xf32> to vector<1x256xf32>
    %69 = vector.broadcast %68 : vector<1x256xf32> to vector<4x256xf32>
    %70 = arith.mulf %66, %69 : vector<4x256xf32>
    %c5_43 = arith.constant 5 : index
    %c0_44 = arith.constant 0 : index
    %c0_45 = arith.constant 0 : index
    %71 = vector.load %arg7[%c5_43, %c0_44, %c0_45] : memref<9x4x4xbf16, #tpu.memory_space<vmem>>, vector<1x4x4xbf16>
    %72 = vector.shape_cast %71 : vector<1x4x4xbf16> to vector<4x4xbf16>
    %73 = arith.truncf %70 : vector<4x256xf32> to vector<4x256xbf16>
    %cst_46 = arith.constant dense<0.000000e+00> : vector<4x256xf32>
    %74 = tpu.matmul %72, %73, %cst_46 {dimension_numbers = #tpu.dot_dimension_numbers<[1], [0], [0], [1], [0, 0, 1, 1], [], []>} : vector<4x4xbf16>, vector<4x256xbf16>, vector<4x256xf32> -> vector<4x256xf32>
    %75 = arith.addf %65, %74 : vector<4x256xf32>
    %c241_i32 = arith.constant 241 : i32
    %76 = tpu.dynamic_rotate %19 by %c241_i32 dim 1 : vector<4x256xf32>, i32 -> vector<4x256xf32>
    %c6 = arith.constant 6 : index
    %c0_47 = arith.constant 0 : index
    %c0_48 = arith.constant 0 : index
    %77 = vector.load %arg3[%c6, %c0_47, %c0_48] : memref<9x1x256xf32, #tpu.memory_space<vmem>>, vector<1x1x256xf32>
    %78 = vector.shape_cast %77 : vector<1x1x256xf32> to vector<1x256xf32>
    %79 = vector.broadcast %78 : vector<1x256xf32> to vector<4x256xf32>
    %80 = arith.mulf %76, %79 : vector<4x256xf32>
    %c6_49 = arith.constant 6 : index
    %c0_50 = arith.constant 0 : index
    %c0_51 = arith.constant 0 : index
    %81 = vector.load %arg7[%c6_49, %c0_50, %c0_51] : memref<9x4x4xbf16, #tpu.memory_space<vmem>>, vector<1x4x4xbf16>
    %82 = vector.shape_cast %81 : vector<1x4x4xbf16> to vector<4x4xbf16>
    %83 = arith.truncf %80 : vector<4x256xf32> to vector<4x256xbf16>
    %cst_52 = arith.constant dense<0.000000e+00> : vector<4x256xf32>
    %84 = tpu.matmul %82, %83, %cst_52 {dimension_numbers = #tpu.dot_dimension_numbers<[1], [0], [0], [1], [0, 0, 1, 1], [], []>} : vector<4x4xbf16>, vector<4x256xbf16>, vector<4x256xf32> -> vector<4x256xf32>
    %85 = arith.addf %75, %84 : vector<4x256xf32>
    %c240_i32 = arith.constant 240 : i32
    %86 = tpu.dynamic_rotate %19 by %c240_i32 dim 1 : vector<4x256xf32>, i32 -> vector<4x256xf32>
    %c7 = arith.constant 7 : index
    %c0_53 = arith.constant 0 : index
    %c0_54 = arith.constant 0 : index
    %87 = vector.load %arg3[%c7, %c0_53, %c0_54] : memref<9x1x256xf32, #tpu.memory_space<vmem>>, vector<1x1x256xf32>
    %88 = vector.shape_cast %87 : vector<1x1x256xf32> to vector<1x256xf32>
    %89 = vector.broadcast %88 : vector<1x256xf32> to vector<4x256xf32>
    %90 = arith.mulf %86, %89 : vector<4x256xf32>
    %c7_55 = arith.constant 7 : index
    %c0_56 = arith.constant 0 : index
    %c0_57 = arith.constant 0 : index
    %91 = vector.load %arg7[%c7_55, %c0_56, %c0_57] : memref<9x4x4xbf16, #tpu.memory_space<vmem>>, vector<1x4x4xbf16>
    %92 = vector.shape_cast %91 : vector<1x4x4xbf16> to vector<4x4xbf16>
    %93 = arith.truncf %90 : vector<4x256xf32> to vector<4x256xbf16>
    %cst_58 = arith.constant dense<0.000000e+00> : vector<4x256xf32>
    %94 = tpu.matmul %92, %93, %cst_58 {dimension_numbers = #tpu.dot_dimension_numbers<[1], [0], [0], [1], [0, 0, 1, 1], [], []>} : vector<4x4xbf16>, vector<4x256xbf16>, vector<4x256xf32> -> vector<4x256xf32>
    %95 = arith.addf %85, %94 : vector<4x256xf32>
    %c239_i32 = arith.constant 239 : i32
    %96 = tpu.dynamic_rotate %19 by %c239_i32 dim 1 : vector<4x256xf32>, i32 -> vector<4x256xf32>
    %c8 = arith.constant 8 : index
    %c0_59 = arith.constant 0 : index
    %c0_60 = arith.constant 0 : index
    %97 = vector.load %arg3[%c8, %c0_59, %c0_60] : memref<9x1x256xf32, #tpu.memory_space<vmem>>, vector<1x1x256xf32>
    %98 = vector.shape_cast %97 : vector<1x1x256xf32> to vector<1x256xf32>
    %99 = vector.broadcast %98 : vector<1x256xf32> to vector<4x256xf32>
    %100 = arith.mulf %96, %99 : vector<4x256xf32>
    %c8_61 = arith.constant 8 : index
    %c0_62 = arith.constant 0 : index
    %c0_63 = arith.constant 0 : index
    %101 = vector.load %arg7[%c8_61, %c0_62, %c0_63] : memref<9x4x4xbf16, #tpu.memory_space<vmem>>, vector<1x4x4xbf16>
    %102 = vector.shape_cast %101 : vector<1x4x4xbf16> to vector<4x4xbf16>
    %103 = arith.truncf %100 : vector<4x256xf32> to vector<4x256xbf16>
    %cst_64 = arith.constant dense<0.000000e+00> : vector<4x256xf32>
    %104 = tpu.matmul %102, %103, %cst_64 {dimension_numbers = #tpu.dot_dimension_numbers<[1], [0], [0], [1], [0, 0, 1, 1], [], []>} : vector<4x4xbf16>, vector<4x256xbf16>, vector<4x256xf32> -> vector<4x256xf32>
    %105 = arith.addf %95, %104 : vector<4x256xf32>
    %c0_65 = arith.constant 0 : index
    %c0_66 = arith.constant 0 : index
    %106 = vector.load %arg8[%c0_65, %c0_66] : memref<4x1xf32, #tpu.memory_space<vmem>>, vector<4x1xf32>
    %107 = vector.broadcast %106 : vector<4x1xf32> to vector<4x256xf32>
    %108 = arith.mulf %105, %107 : vector<4x256xf32>
    %c0_67 = arith.constant 0 : index
    %c0_68 = arith.constant 0 : index
    %109 = vector.load %arg9[%c0_67, %c0_68] : memref<4x1xf32, #tpu.memory_space<vmem>>, vector<4x1xf32>
    %110 = vector.broadcast %109 : vector<4x1xf32> to vector<4x256xf32>
    %111 = arith.addf %108, %110 : vector<4x256xf32>
    %cst_69 = arith.constant 0.000000e+00 : f32
    %cst_70 = arith.constant 1.000000e+00 : f32
    %112 = vector.broadcast %cst_69 : f32 to vector<4x256xf32>
    %113 = arith.maximumf %112, %111 : vector<4x256xf32>
    %114 = vector.broadcast %cst_70 : f32 to vector<4x256xf32>
    %115 = arith.minimumf %114, %113 : vector<4x256xf32>
    %cst_71 = arith.constant 1.500000e+01 : f32
    %116 = vector.broadcast %cst_71 : f32 to vector<4x256xf32>
    %117 = arith.mulf %115, %116 : vector<4x256xf32>
    %118 = math.roundeven %117 : vector<4x256xf32>
    %cst_72 = arith.constant 1.500000e+01 : f32
    %119 = vector.broadcast %cst_72 : f32 to vector<4x256xf32>
    %120 = arith.divf %118, %119 : vector<4x256xf32>
    %c0_73 = arith.constant 0 : index
    %c0_74 = arith.constant 0 : index
    %121 = vector.load %arg10[%c0_73, %c0_74] : memref<16x4xbf16, #tpu.memory_space<vmem>>, vector<16x4xbf16>
    %122 = arith.truncf %120 : vector<4x256xf32> to vector<4x256xbf16>
    %cst_75 = arith.constant dense<0.000000e+00> : vector<16x256xf32>
    %123 = tpu.matmul %121, %122, %cst_75 {dimension_numbers = #tpu.dot_dimension_numbers<[1], [0], [0], [1], [0, 0, 1, 1], [], []>} : vector<16x4xbf16>, vector<4x256xbf16>, vector<16x256xf32> -> vector<16x256xf32>
    %c0_76 = arith.constant 0 : index
    %c0_77 = arith.constant 0 : index
    %124 = vector.load %arg11[%c0_76, %c0_77] : memref<16x1xf32, #tpu.memory_space<vmem>>, vector<16x1xf32>
    %125 = vector.broadcast %124 : vector<16x1xf32> to vector<16x256xf32>
    %126 = arith.mulf %123, %125 : vector<16x256xf32>
    %c0_78 = arith.constant 0 : index
    %c0_79 = arith.constant 0 : index
    %127 = vector.load %arg12[%c0_78, %c0_79] : memref<16x1xf32, #tpu.memory_space<vmem>>, vector<16x1xf32>
    %128 = vector.broadcast %127 : vector<16x1xf32> to vector<16x256xf32>
    %129 = arith.addf %126, %128 : vector<16x256xf32>
    %130 = arith.addf %129, %1 : vector<16x256xf32>
    %c0_80 = arith.constant 0 : index
    %c0_81 = arith.constant 0 : index
    %131 = vector.load %arg13[%c0_80, %c0_81] : memref<16x16xbf16, #tpu.memory_space<vmem>>, vector<16x16xbf16>
    %132 = arith.truncf %130 : vector<16x256xf32> to vector<16x256xbf16>
    %cst_82 = arith.constant dense<0.000000e+00> : vector<16x256xf32>
    %133 = tpu.matmul %131, %132, %cst_82 {dimension_numbers = #tpu.dot_dimension_numbers<[1], [0], [0], [1], [0, 0, 1, 1], [], []>} : vector<16x16xbf16>, vector<16x256xbf16>, vector<16x256xf32> -> vector<16x256xf32>
    %c0_83 = arith.constant 0 : index
    %c0_84 = arith.constant 0 : index
    %134 = vector.load %arg14[%c0_83, %c0_84] : memref<16x1xf32, #tpu.memory_space<vmem>>, vector<16x1xf32>
    %135 = vector.broadcast %134 : vector<16x1xf32> to vector<16x256xf32>
    %136 = arith.mulf %133, %135 : vector<16x256xf32>
    %c0_85 = arith.constant 0 : index
    %c0_86 = arith.constant 0 : index
    %137 = vector.load %arg15[%c0_85, %c0_86] : memref<16x1xf32, #tpu.memory_space<vmem>>, vector<16x1xf32>
    %138 = vector.broadcast %137 : vector<16x1xf32> to vector<16x256xf32>
    %139 = arith.addf %136, %138 : vector<16x256xf32>
    %c0_87 = arith.constant 0 : index
    %c0_88 = arith.constant 0 : index
    %c0_89 = arith.constant 0 : index
    %140 = vector.load %arg2[%c0_87, %c0_88, %c0_89] : memref<1x16x256xf32, #tpu.memory_space<vmem>>, vector<1x16x256xf32>
    %141 = vector.shape_cast %140 : vector<1x16x256xf32> to vector<16x256xf32>
    %142 = arith.addf %141, %139 : vector<16x256xf32>
    %cst_90 = arith.constant 0.000000e+00 : f32
    %143 = vector.broadcast %cst_90 : f32 to vector<16x256xf32>
    %144 = arith.maximumf %142, %143 : vector<16x256xf32>
    %c0_91 = arith.constant 0 : index
    %c0_92 = arith.constant 0 : index
    %c0_93 = arith.constant 0 : index
    %145 = vector.load %arg17[%c0_91, %c0_92, %c0_93] : memref<1x16x256xf32, #tpu.memory_space<vmem>>, vector<1x16x256xf32>
    %146 = vector.shape_cast %145 : vector<1x16x256xf32> to vector<16x256xf32>
    %147 = vector.shape_cast %144 : vector<16x256xf32> to vector<1x16x256xf32>
    tpu.vector_store %arg17[%c0_91, %c0_92, %c0_93], %147 {strides = array<i32>} : memref<1x16x256xf32, #tpu.memory_space<vmem>>, vector<1x16x256xf32>,
    %cst_94 = arith.constant 0.000000e+00 : f32
    %cst_95 = arith.constant 1.000000e+00 : f32
    %148 = vector.broadcast %cst_94 : f32 to vector<16x256xf32>
    %149 = arith.maximumf %148, %130 : vector<16x256xf32>
    %150 = vector.broadcast %cst_95 : f32 to vector<16x256xf32>
    %151 = arith.minimumf %150, %149 : vector<16x256xf32>
    %cst_96 = arith.constant 1.500000e+01 : f32
    %152 = vector.broadcast %cst_96 : f32 to vector<16x256xf32>
    %153 = arith.mulf %151, %152 : vector<16x256xf32>
    %154 = math.roundeven %153 : vector<16x256xf32>
    %cst_97 = arith.constant 1.500000e+01 : f32
    %155 = vector.broadcast %cst_97 : f32 to vector<16x256xf32>
    %156 = arith.divf %154, %155 : vector<16x256xf32>
    %c0_98 = arith.constant 0 : index
    %c0_99 = arith.constant 0 : index
    %c0_100 = arith.constant 0 : index
    %157 = vector.load %arg16[%c0_98, %c0_99, %c0_100] : memref<1x16x256xf32, #tpu.memory_space<vmem>>, vector<1x16x256xf32>
    %158 = vector.shape_cast %157 : vector<1x16x256xf32> to vector<16x256xf32>
    %159 = vector.shape_cast %156 : vector<16x256xf32> to vector<1x16x256xf32>
    tpu.vector_store %arg16[%c0_98, %c0_99, %c0_100], %159 {strides = array<i32>} : memref<1x16x256xf32, #tpu.memory_space<vmem>>, vector<1x16x256xf32>,
    return
  }
  func.func @transform_0(%arg0: i32) -> (i32, i32, i32) {
    %c0_i32 = arith.constant 0 : i32
    %c0_i32_0 = arith.constant 0 : i32
    %c0_i32_1 = arith.constant 0 : i32
    return %arg0, %c0_i32, %c0_i32_0 : i32, i32, i32
  }
  func.func @transform_1(%arg0: i32) -> (i32, i32, i32) {
    %c0_i32 = arith.constant 0 : i32
    %c0_i32_0 = arith.constant 0 : i32
    %c0_i32_1 = arith.constant 0 : i32
    return %arg0, %c0_i32, %c0_i32_0 : i32, i32, i32
  }
  func.func @transform_2(%arg0: i32) -> (i32, i32, i32) {
    %c0_i32 = arith.constant 0 : i32
    %c0_i32_0 = arith.constant 0 : i32
    %c0_i32_1 = arith.constant 0 : i32
    %c0_i32_2 = arith.constant 0 : i32
    return %c0_i32, %c0_i32_0, %c0_i32_1 : i32, i32, i32
  }
  func.func @transform_3(%arg0: i32) -> (i32, i32) {
    %c0_i32 = arith.constant 0 : i32
    %c0_i32_0 = arith.constant 0 : i32
    %c0_i32_1 = arith.constant 0 : i32
    return %c0_i32, %c0_i32_0 : i32, i32
  }
  func.func @transform_4(%arg0: i32) -> (i32, i32) {
    %c0_i32 = arith.constant 0 : i32
    %c0_i32_0 = arith.constant 0 : i32
    %c0_i32_1 = arith.constant 0 : i32
    return %c0_i32, %c0_i32_0 : i32, i32
  }
  func.func @transform_5(%arg0: i32) -> (i32, i32) {
    %c0_i32 = arith.constant 0 : i32
    %c0_i32_0 = arith.constant 0 : i32
    %c0_i32_1 = arith.constant 0 : i32
    return %c0_i32, %c0_i32_0 : i32, i32
  }
  func.func @transform_6(%arg0: i32) -> (i32, i32, i32) {
    %c0_i32 = arith.constant 0 : i32
    %c0_i32_0 = arith.constant 0 : i32
    %c0_i32_1 = arith.constant 0 : i32
    %c0_i32_2 = arith.constant 0 : i32
    return %c0_i32, %c0_i32_0, %c0_i32_1 : i32, i32, i32
  }
  func.func @transform_7(%arg0: i32) -> (i32, i32) {
    %c0_i32 = arith.constant 0 : i32
    %c0_i32_0 = arith.constant 0 : i32
    %c0_i32_1 = arith.constant 0 : i32
    return %c0_i32, %c0_i32_0 : i32, i32
  }
  func.func @transform_8(%arg0: i32) -> (i32, i32) {
    %c0_i32 = arith.constant 0 : i32
    %c0_i32_0 = arith.constant 0 : i32
    %c0_i32_1 = arith.constant 0 : i32
    return %c0_i32, %c0_i32_0 : i32, i32
  }
  func.func @transform_9(%arg0: i32) -> (i32, i32) {
    %c0_i32 = arith.constant 0 : i32
    %c0_i32_0 = arith.constant 0 : i32
    %c0_i32_1 = arith.constant 0 : i32
    return %c0_i32, %c0_i32_0 : i32, i32
  }
  func.func @transform_10(%arg0: i32) -> (i32, i32) {
    %c0_i32 = arith.constant 0 : i32
    %c0_i32_0 = arith.constant 0 : i32
    %c0_i32_1 = arith.constant 0 : i32
    return %c0_i32, %c0_i32_0 : i32, i32
  }
  func.func @transform_11(%arg0: i32) -> (i32, i32) {
    %c0_i32 = arith.constant 0 : i32
    %c0_i32_0 = arith.constant 0 : i32
    %c0_i32_1 = arith.constant 0 : i32
    return %c0_i32, %c0_i32_0 : i32, i32
  }
  func.func @transform_12(%arg0: i32) -> (i32, i32) {
    %c0_i32 = arith.constant 0 : i32
    %c0_i32_0 = arith.constant 0 : i32
    %c0_i32_1 = arith.constant 0 : i32
    return %c0_i32, %c0_i32_0 : i32, i32
  }
  func.func @transform_13(%arg0: i32) -> (i32, i32) {
    %c0_i32 = arith.constant 0 : i32
    %c0_i32_0 = arith.constant 0 : i32
    %c0_i32_1 = arith.constant 0 : i32
    return %c0_i32, %c0_i32_0 : i32, i32
  }
  func.func @transform_14(%arg0: i32) -> (i32, i32) {
    %c0_i32 = arith.constant 0 : i32
    %c0_i32_0 = arith.constant 0 : i32
    %c0_i32_1 = arith.constant 0 : i32
    return %c0_i32, %c0_i32_0 : i32, i32
  }
  func.func @transform_15(%arg0: i32) -> (i32, i32, i32) {
    %c0_i32 = arith.constant 0 : i32
    %c0_i32_0 = arith.constant 0 : i32
    %c0_i32_1 = arith.constant 0 : i32
    return %arg0, %c0_i32, %c0_i32_0 : i32, i32, i32
  }
  func.func @transform_16(%arg0: i32) -> (i32, i32, i32) {
    %c0_i32 = arith.constant 0 : i32
    %c0_i32_0 = arith.constant 0 : i32
    %c0_i32_1 = arith.constant 0 : i32
    return %arg0, %c0_i32, %c0_i32_0 : i32, i32, i32
  }
}

</mosaic_0001>

<llo_original>
// kernel: bottleneck_forward.1
$region0: #{bottleneck_forward.1}
  #allocation0 [shape = 'u32[]', space=smem, size = 0x4, offset = 0x4, fixed_abs, tag = 'smem constant byte address 0x4 - core index']
  #allocation1 [shape = 'u32[144,128]{1,0:T(1,128)}', space=vmem, size = 0x12000, scoped, tag = 'internal scratch']
  %s0 = inlined_call_operand.vmem [shape: f32[2,16,256], index: 0, kind: input, shape index: {}]
  %s1 = inlined_call_operand.vmem [shape: f32[2,16,256], index: 1, kind: input, shape index: {}]
  %s2 = inlined_call_operand.vmem [shape: f32[9,1,256], index: 2, kind: input, shape index: {}]
  %s3 = inlined_call_operand.vmem [shape: bf16[4,16], index: 3, kind: input, shape index: {}]
  %s4 = inlined_call_operand.vmem [shape: f32[4,1], index: 4, kind: input, shape index: {}]
  %s5 = inlined_call_operand.vmem [shape: f32[4,1], index: 5, kind: input, shape index: {}]
  %s6 = inlined_call_operand.vmem [shape: bf16[9,4,4], index: 6, kind: input, shape index: {}]
  %s7 = inlined_call_operand.vmem [shape: f32[4,1], index: 7, kind: input, shape index: {}]
  %s8 = inlined_call_operand.vmem [shape: f32[4,1], index: 8, kind: input, shape index: {}]
  %s9 = inlined_call_operand.vmem [shape: bf16[16,4], index: 9, kind: input, shape index: {}]
  %s10 = inlined_call_operand.vmem [shape: f32[16,1], index: 10, kind: input, shape index: {}]
  %s11 = inlined_call_operand.vmem [shape: f32[16,1], index: 11, kind: input, shape index: {}]
  %s12 = inlined_call_operand.vmem [shape: bf16[16,16], index: 12, kind: input, shape index: {}]
  %s13 = inlined_call_operand.vmem [shape: f32[16,1], index: 13, kind: input, shape index: {}]
  %s14 = inlined_call_operand.vmem [shape: f32[16,1], index: 14, kind: input, shape index: {}]
  %s15 = inlined_call_operand.vmem [shape: f32[2,16,256], index: 15, kind: output, shape index: {0}]
  %s16 = inlined_call_operand.vmem [shape: f32[2,16,256], index: 16, kind: output, shape index: {1}]
  %17 = xla_tuple %s15, %s16
  %s18 = sld [smem:[#allocation0]]
  $region101: #{bottleneck_forward.1} parent=0
    _
  %s20 = ssub.s32 1, %s18
  %s21 = scalar_select 0, %s20, %s18
  loop: start=0, step=1, limit=4
  $region2: #{bottleneck_forward.1} parent=0 // loop_pre_header
    _
  $region3: #{bottleneck_forward.1} parent=0 // loop_header
    %s23 = sphi 0, %s27
    %p24 = scmp.ge.s32.totalorder %s23, 4
    %s33 = sphi 0, %s35
    %s36 = sphi 0, %s33
    %s37 = sphi 0, %s36
    %s53 = sphi 0, %s37
    %s59 = sphi 0, %s61
    %s62 = sphi 0, %s59
    %s63 = sphi 0, %s62
    %s79 = sphi 0, %s63
    %s83 = sphi 0, %s83
    %s85 = sphi 0, %s83
    %s86 = sphi 0, %s85
    %s100 = sphi 0, %s86
    %s104 = sphi 0, %s104
    %s106 = sphi 0, %s104
    %s107 = sphi 0, %s106
    %s121 = sphi 0, %s107
    %s125 = sphi 0, %s125
    %s127 = sphi 0, %s125
    %s128 = sphi 0, %s127
    %s142 = sphi 0, %s128
    %s146 = sphi 0, %s146
    %s148 = sphi 0, %s146
    %s149 = sphi 0, %s148
    %s163 = sphi 0, %s149
    %s167 = sphi 0, %s167
    %s169 = sphi 0, %s167
    %s170 = sphi 0, %s169
    %s184 = sphi 0, %s170
    %s188 = sphi 0, %s188
    %s190 = sphi 0, %s188
    %s191 = sphi 0, %s190
    %s205 = sphi 0, %s191
    %s209 = sphi 0, %s209
    %s211 = sphi 0, %s209
    %s212 = sphi 0, %s211
    %s226 = sphi 0, %s212
    %s230 = sphi 0, %s230
    %s232 = sphi 0, %s230
    %s233 = sphi 0, %s232
    %s247 = sphi 0, %s233
    %s251 = sphi 0, %s251
    %s253 = sphi 0, %s251
    %s254 = sphi 0, %s253
    %s268 = sphi 0, %s254
    %s272 = sphi 0, %s272
    %s274 = sphi 0, %s272
    %s275 = sphi 0, %s274
    %s289 = sphi 0, %s275
    %s293 = sphi 0, %s293
    %s295 = sphi 0, %s293
    %s296 = sphi 0, %s295
    %s310 = sphi 0, %s296
    %s314 = sphi 0, %s314
    %s316 = sphi 0, %s314
    %s317 = sphi 0, %s316
    %s331 = sphi 0, %s317
    %s335 = sphi 0, %s335
    %s337 = sphi 0, %s335
    %s338 = sphi 0, %s337
    %s352 = sphi 0, %s338
    %s358 = sphi 0, %s360
    %s361 = sphi 0, %s358
    %s362 = sphi 0, %s361
    %s378 = sphi 0, %s362
    %s384 = sphi 0, %s386
    %s387 = sphi 0, %s384
    %s388 = sphi 0, %s387
    %s404 = sphi 0, %s388
  $region4: #{bottleneck_forward.1} parent=0 // loop_header_branch
    %26 = sbr.rel (%p24) target = $region8
  $region5: #{bottleneck_forward.1} parent=0 // loop_body
    %s28 = ssub.s32 %s23, 1
    %s29 = ssub.s32 %s23, 2
    %s30 = sadd.s32 %s23, 1
    %s31 = ssub.s32 %s23, %s30
    %p32 = scmp.eq.s32.totalorder %s31, 0
    %s34 = sadd.s32 %s33, 1
    %s35 = scalar_select %p32, %s33, %s34
    %p38 = pneg %p32
    %p39 = scmp.eq.s32.totalorder %s23, 1
    %p40 = por %p38, %p39
    %p41 = scmp.ne.s32.totalorder %s33, %s36
    %p42 = scmp.eq.s32.totalorder %s23, 0
    %p43 = por %p41, %p42
    %p44 = scmp.ne.s32.totalorder %s33, %s36
    %p45 = scmp.eq.s32.totalorder %s28, 1
    %p46 = por %p44, %p45
    %p47 = scmp.ne.s32.totalorder %s36, %s37
    %p48 = scmp.eq.s32.totalorder %s28, 0
    %p49 = por %p47, %p48
    %p50 = scmp.ne.s32.totalorder %s36, %s37
    %p51 = scmp.eq.s32.totalorder %s29, 1
    %p52 = por %p50, %p51
    %p54 = scmp.ne.s32.totalorder %s37, %s53
    %p55 = scmp.eq.s32.totalorder %s29, 0
    %p56 = por %p54, %p55
    %s57 = ssub.s32 %s23, %s30
    %p58 = scmp.eq.s32.totalorder %s57, 0
    %s60 = sadd.s32 %s59, 1
    %s61 = scalar_select %p58, %s59, %s60
    %p64 = pneg %p58
    %p65 = scmp.eq.s32.totalorder %s23, 1
    %p66 = por %p64, %p65
    %p67 = scmp.ne.s32.totalorder %s59, %s62
    %p68 = scmp.eq.s32.totalorder %s23, 0
    %p69 = por %p67, %p68
    %p70 = scmp.ne.s32.totalorder %s59, %s62
    %p71 = scmp.eq.s32.totalorder %s28, 1
    %p72 = por %p70, %p71
    %p73 = scmp.ne.s32.totalorder %s62, %s63
    %p74 = scmp.eq.s32.totalorder %s28, 0
    %p75 = por %p73, %p74
    %p76 = scmp.ne.s32.totalorder %s62, %s63
    %p77 = scmp.eq.s32.totalorder %s29, 1
    %p78 = por %p76, %p77
    %p80 = scmp.ne.s32.totalorder %s63, %s79
    %p81 = scmp.eq.s32.totalorder %s29, 0
    %p82 = por %p80, %p81
    %s84 = sadd.s32 %s83, 1
    %p87 = scmp.eq.s32.totalorder %s23, 1
    %p88 = scmp.ne.s32.totalorder %s83, %s85
    %p89 = scmp.eq.s32.totalorder %s23, 0
    %p90 = por %p88, %p89
    %p91 = scmp.ne.s32.totalorder %s83, %s85
    %p92 = scmp.eq.s32.totalorder %s28, 1
    %p93 = por %p91, %p92
    %p94 = scmp.ne.s32.totalorder %s85, %s86
    %p95 = scmp.eq.s32.totalorder %s28, 0
    %p96 = por %p94, %p95
    %p97 = scmp.ne.s32.totalorder %s85, %s86
    %p98 = scmp.eq.s32.totalorder %s29, 1
    %p99 = por %p97, %p98
    %p101 = scmp.ne.s32.totalorder %s86, %s100
    %p102 = scmp.eq.s32.totalorder %s29, 0
    %p103 = por %p101, %p102
    %s105 = sadd.s32 %s104, 1
    %p108 = scmp.eq.s32.totalorder %s23, 1
    %p109 = scmp.ne.s32.totalorder %s104, %s106
    %p110 = scmp.eq.s32.totalorder %s23, 0
    %p111 = por %p109, %p110
    %p112 = scmp.ne.s32.totalorder %s104, %s106
    %p113 = scmp.eq.s32.totalorder %s28, 1
    %p114 = por %p112, %p113
    %p115 = scmp.ne.s32.totalorder %s106, %s107
    %p116 = scmp.eq.s32.totalorder %s28, 0
    %p117 = por %p115, %p116
    %p118 = scmp.ne.s32.totalorder %s106, %s107
    %p119 = scmp.eq.s32.totalorder %s29, 1
    %p120 = por %p118, %p119
    %p122 = scmp.ne.s32.totalorder %s107, %s121
    %p123 = scmp.eq.s32.totalorder %s29, 0
    %p124 = por %p122, %p123
    %s126 = sadd.s32 %s125, 1
    %p129 = scmp.eq.s32.totalorder %s23, 1
    %p130 = scmp.ne.s32.totalorder %s125, %s127
    %p131 = scmp.eq.s32.totalorder %s23, 0
    %p132 = por %p130, %p131
    %p133 = scmp.ne.s32.totalorder %s125, %s127
    %p134 = scmp.eq.s32.totalorder %s28, 1
    %p135 = por %p133, %p134
    %p136 = scmp.ne.s32.totalorder %s127, %s128
    %p137 = scmp.eq.s32.totalorder %s28, 0
    %p138 = por %p136, %p137
    %p139 = scmp.ne.s32.totalorder %s127, %s128
    %p140 = scmp.eq.s32.totalorder %s29, 1
    %p141 = por %p139, %p140
    %p143 = scmp.ne.s32.totalorder %s128, %s142
    %p144 = scmp.eq.s32.totalorder %s29, 0
    %p145 = por %p143, %p144
    %s147 = sadd.s32 %s146, 1
    %p150 = scmp.eq.s32.totalorder %s23, 1
    %p151 = scmp.ne.s32.totalorder %s146, %s148
    %p152 = scmp.eq.s32.totalorder %s23, 0
    %p153 = por %p151, %p152
    %p154 = scmp.ne.s32.totalorder %s146, %s148
    %p155 = scmp.eq.s32.totalorder %s28, 1
    %p156 = por %p154, %p155
    %p157 = scmp.ne.s32.totalorder %s148, %s149
    %p158 = scmp.eq.s32.totalorder %s28, 0
    %p159 = por %p157, %p158
    %p160 = scmp.ne.s32.totalorder %s148, %s149
    %p161 = scmp.eq.s32.totalorder %s29, 1
    %p162 = por %p160, %p161
    %p164 = scmp.ne.s32.totalorder %s149, %s163
    %p165 = scmp.eq.s32.totalorder %s29, 0
    %p166 = por %p164, %p165
    %s168 = sadd.s32 %s167, 1
    %p171 = scmp.eq.s32.totalorder %s23, 1
    %p172 = scmp.ne.s32.totalorder %s167, %s169
    %p173 = scmp.eq.s32.totalorder %s23, 0
    %p174 = por %p172, %p173
    %p175 = scmp.ne.s32.totalorder %s167, %s169
    %p176 = scmp.eq.s32.totalorder %s28, 1
    %p177 = por %p175, %p176
    %p178 = scmp.ne.s32.totalorder %s169, %s170
    %p179 = scmp.eq.s32.totalorder %s28, 0
    %p180 = por %p178, %p179
    %p181 = scmp.ne.s32.totalorder %s169, %s170
    %p182 = scmp.eq.s32.totalorder %s29, 1
    %p183 = por %p181, %p182
    %p185 = scmp.ne.s32.totalorder %s170, %s184
    %p186 = scmp.eq.s32.totalorder %s29, 0
    %p187 = por %p185, %p186
    %s189 = sadd.s32 %s188, 1
    %p192 = scmp.eq.s32.totalorder %s23, 1
    %p193 = scmp.ne.s32.totalorder %s188, %s190
    %p194 = scmp.eq.s32.totalorder %s23, 0
    %p195 = por %p193, %p194
    %p196 = scmp.ne.s32.totalorder %s188, %s190
    %p197 = scmp.eq.s32.totalorder %s28, 1
    %p198 = por %p196, %p197
    %p199 = scmp.ne.s32.totalorder %s190, %s191
    %p200 = scmp.eq.s32.totalorder %s28, 0
    %p201 = por %p199, %p200
    %p202 = scmp.ne.s32.totalorder %s190, %s191
    %p203 = scmp.eq.s32.totalorder %s29, 1
    %p204 = por %p202, %p203
    %p206 = scmp.ne.s32.totalorder %s191, %s205
    %p207 = scmp.eq.s32.totalorder %s29, 0
    %p208 = por %p206, %p207
    %s210 = sadd.s32 %s209, 1
    %p213 = scmp.eq.s32.totalorder %s23, 1
    %p214 = scmp.ne.s32.totalorder %s209, %s211
    %p215 = scmp.eq.s32.totalorder %s23, 0
    %p216 = por %p214, %p215
    %p217 = scmp.ne.s32.totalorder %s209, %s211
    %p218 = scmp.eq.s32.totalorder %s28, 1
    %p219 = por %p217, %p218
    %p220 = scmp.ne.s32.totalorder %s211, %s212
    %p221 = scmp.eq.s32.totalorder %s28, 0
    %p222 = por %p220, %p221
    %p223 = scmp.ne.s32.totalorder %s211, %s212
    %p224 = scmp.eq.s32.totalorder %s29, 1
    %p225 = por %p223, %p224
    %p227 = scmp.ne.s32.totalorder %s212, %s226
    %p228 = scmp.eq.s32.totalorder %s29, 0
    %p229 = por %p227, %p228
    %s231 = sadd.s32 %s230, 1
    %p234 = scmp.eq.s32.totalorder %s23, 1
    %p235 = scmp.ne.s32.totalorder %s230, %s232
    %p236 = scmp.eq.s32.totalorder %s23, 0
    %p237 = por %p235, %p236
    %p238 = scmp.ne.s32.totalorder %s230, %s232
    %p239 = scmp.eq.s32.totalorder %s28, 1
    %p240 = por %p238, %p239
    %p241 = scmp.ne.s32.totalorder %s232, %s233
    %p242 = scmp.eq.s32.totalorder %s28, 0
    %p243 = por %p241, %p242
    %p244 = scmp.ne.s32.totalorder %s232, %s233
    %p245 = scmp.eq.s32.totalorder %s29, 1
    %p246 = por %p244, %p245
    %p248 = scmp.ne.s32.totalorder %s233, %s247
    %p249 = scmp.eq.s32.totalorder %s29, 0
    %p250 = por %p248, %p249
    %s252 = sadd.s32 %s251, 1
    %p255 = scmp.eq.s32.totalorder %s23, 1
    %p256 = scmp.ne.s32.totalorder %s251, %s253
    %p257 = scmp.eq.s32.totalorder %s23, 0
    %p258 = por %p256, %p257
    %p259 = scmp.ne.s32.totalorder %s251, %s253
    %p260 = scmp.eq.s32.totalorder %s28, 1
    %p261 = por %p259, %p260
    %p262 = scmp.ne.s32.totalorder %s253, %s254
    %p263 = scmp.eq.s32.totalorder %s28, 0
    %p264 = por %p262, %p263
    %p265 = scmp.ne.s32.totalorder %s253, %s254
    %p266 = scmp.eq.s32.totalorder %s29, 1
    %p267 = por %p265, %p266
    %p269 = scmp.ne.s32.totalorder %s254, %s268
    %p270 = scmp.eq.s32.totalorder %s29, 0
    %p271 = por %p269, %p270
    %s273 = sadd.s32 %s272, 1
    %p276 = scmp.eq.s32.totalorder %s23, 1
    %p277 = scmp.ne.s32.totalorder %s272, %s274
    %p278 = scmp.eq.s32.totalorder %s23, 0
    %p279 = por %p277, %p278
    %p280 = scmp.ne.s32.totalorder %s272, %s274
    %p281 = scmp.eq.s32.totalorder %s28, 1
    %p282 = por %p280, %p281
    %p283 = scmp.ne.s32.totalorder %s274, %s275
    %p284 = scmp.eq.s32.totalorder %s28, 0
    %p285 = por %p283, %p284
    %p286 = scmp.ne.s32.totalorder %s274, %s275
    %p287 = scmp.eq.s32.totalorder %s29, 1
    %p288 = por %p286, %p287
    %p290 = scmp.ne.s32.totalorder %s275, %s289
    %p291 = scmp.eq.s32.totalorder %s29, 0
    %p292 = por %p290, %p291
    %s294 = sadd.s32 %s293, 1
    %p297 = scmp.eq.s32.totalorder %s23, 1
    %p298 = scmp.ne.s32.totalorder %s293, %s295
    %p299 = scmp.eq.s32.totalorder %s23, 0
    %p300 = por %p298, %p299
    %p301 = scmp.ne.s32.totalorder %s293, %s295
    %p302 = scmp.eq.s32.totalorder %s28, 1
    %p303 = por %p301, %p302
    %p304 = scmp.ne.s32.totalorder %s295, %s296
    %p305 = scmp.eq.s32.totalorder %s28, 0
    %p306 = por %p304, %p305
    %p307 = scmp.ne.s32.totalorder %s295, %s296
    %p308 = scmp.eq.s32.totalorder %s29, 1
    %p309 = por %p307, %p308
    %p311 = scmp.ne.s32.totalorder %s296, %s310
    %p312 = scmp.eq.s32.totalorder %s29, 0
    %p313 = por %p311, %p312
    %s315 = sadd.s32 %s314, 1
    %p318 = scmp.eq.s32.totalorder %s23, 1
    %p319 = scmp.ne.s32.totalorder %s314, %s316
    %p320 = scmp.eq.s32.totalorder %s23, 0
    %p321 = por %p319, %p320
    %p322 = scmp.ne.s32.totalorder %s314, %s316
    %p323 = scmp.eq.s32.totalorder %s28, 1
    %p324 = por %p322, %p323
    %p325 = scmp.ne.s32.totalorder %s316, %s317
    %p326 = scmp.eq.s32.totalorder %s28, 0
    %p327 = por %p325, %p326
    %p328 = scmp.ne.s32.totalorder %s316, %s317
    %p329 = scmp.eq.s32.totalorder %s29, 1
    %p330 = por %p328, %p329
    %p332 = scmp.ne.s32.totalorder %s317, %s331
    %p333 = scmp.eq.s32.totalorder %s29, 0
    %p334 = por %p332, %p333
    %s336 = sadd.s32 %s335, 1
    %p339 = scmp.eq.s32.totalorder %s23, 1
    %p340 = scmp.ne.s32.totalorder %s335, %s337
    %p341 = scmp.eq.s32.totalorder %s23, 0
    %p342 = por %p340, %p341
    %p343 = scmp.ne.s32.totalorder %s335, %s337
    %p344 = scmp.eq.s32.totalorder %s28, 1
    %p345 = por %p343, %p344
    %p346 = scmp.ne.s32.totalorder %s337, %s338
    %p347 = scmp.eq.s32.totalorder %s28, 0
    %p348 = por %p346, %p347
    %p349 = scmp.ne.s32.totalorder %s337, %s338
    %p350 = scmp.eq.s32.totalorder %s29, 1
    %p351 = por %p349, %p350
    %p353 = scmp.ne.s32.totalorder %s338, %s352
    %p354 = scmp.eq.s32.totalorder %s29, 0
    %p355 = por %p353, %p354
    %s356 = ssub.s32 %s23, %s30
    %p357 = scmp.eq.s32.totalorder %s356, 0
    %s359 = sadd.s32 %s358, 1
    %s360 = scalar_select %p357, %s358, %s359
    %p363 = pneg %p357
    %p364 = scmp.eq.s32.totalorder %s23, 1
    %p365 = por %p363, %p364
    %p366 = scmp.ne.s32.totalorder %s358, %s361
    %p367 = scmp.eq.s32.totalorder %s23, 0
    %p368 = por %p366, %p367
    %p369 = scmp.ne.s32.totalorder %s358, %s361
    %p370 = scmp.eq.s32.totalorder %s28, 1
    %p371 = por %p369, %p370
    %p372 = scmp.ne.s32.totalorder %s361, %s362
    %p373 = scmp.eq.s32.totalorder %s28, 0
    %p374 = por %p372, %p373
    %p375 = scmp.ne.s32.totalorder %s361, %s362
    %p376 = scmp.eq.s32.totalorder %s29, 1
    %p377 = por %p375, %p376
    %p379 = scmp.ne.s32.totalorder %s362, %s378
    %p380 = scmp.eq.s32.totalorder %s29, 0
    %p381 = por %p379, %p380
    %s382 = ssub.s32 %s23, %s30
    %p383 = scmp.eq.s32.totalorder %s382, 0
    %s385 = sadd.s32 %s384, 1
    %s386 = scalar_select %p383, %s384, %s385
    %p389 = pneg %p383
    %p390 = scmp.eq.s32.totalorder %s23, 1
    %p391 = por %p389, %p390
    %p392 = scmp.ne.s32.totalorder %s384, %s387
    %p393 = scmp.eq.s32.totalorder %s23, 0
    %p394 = por %p392, %p393
    %p395 = scmp.ne.s32.totalorder %s384, %s387
    %p396 = scmp.eq.s32.totalorder %s28, 1
    %p397 = por %p395, %p396
    %p398 = scmp.ne.s32.totalorder %s387, %s388
    %p399 = scmp.eq.s32.totalorder %s28, 0
    %p400 = por %p398, %p399
    %p401 = scmp.ne.s32.totalorder %s387, %s388
    %p402 = scmp.eq.s32.totalorder %s29, 1
    %p403 = por %p401, %p402
    %p405 = scmp.ne.s32.totalorder %s388, %s404
    %p406 = scmp.eq.s32.totalorder %s29, 0
    %p407 = por %p405, %p406
    %p408 = scmp.le.s32.totalorder 1, %s23
    %p409 = scmp.lt.s32.totalorder %s23, 3
    %p410 = pnand %p408, %p409
    %p411 = pneg %p410
    // Predicated region
    $region9: #{bottleneck_forward.1} parent=5 // pred_check
      _
    $region10: #{bottleneck_forward.1} parent=5 // pred_check_branch
      %413 = sbr.rel (%p410) target = $region12
    $region11: #{bottleneck_forward.1} parent=5 // pred_region
      %s414 = ssub.s32 %s23, 1
      // Predicated region
      $region13: #{bottleneck_forward.1} parent=11 // pred_check
        %p415 = pneg %p96
      $region14: #{bottleneck_forward.1} parent=11 // pred_check_branch
        %417 = sbr.rel (%p415) target = $region16
      $region15: #{bottleneck_forward.1} parent=11 // pred_region
        _
      $region16: #{bottleneck_forward.1} parent=11 // pred_fallthru
        _
      // Predicated region
      $region17: #{bottleneck_forward.1} parent=11 // pred_check
        %p418 = pneg %p117
      $region18: #{bottleneck_forward.1} parent=11 // pred_check_branch
        %420 = sbr.rel (%p418) target = $region20
      $region19: #{bottleneck_forward.1} parent=11 // pred_region
        _
      $region20: #{bottleneck_forward.1} parent=11 // pred_fallthru
        _
      // Predicated region
      $region21: #{bottleneck_forward.1} parent=11 // pred_check
        %p421 = pneg %p138
      $region22: #{bottleneck_forward.1} parent=11 // pred_check_branch
        %423 = sbr.rel (%p421) target = $region24
      $region23: #{bottleneck_forward.1} parent=11 // pred_region
        _
      $region24: #{bottleneck_forward.1} parent=11 // pred_fallthru
        _
      // Predicated region
      $region25: #{bottleneck_forward.1} parent=11 // pred_check
        %p424 = pneg %p159
      $region26: #{bottleneck_forward.1} parent=11 // pred_check_branch
        %426 = sbr.rel (%p424) target = $region28
      $region27: #{bottleneck_forward.1} parent=11 // pred_region
        _
      $region28: #{bottleneck_forward.1} parent=11 // pred_fallthru
        _
      // Predicated region
      $region29: #{bottleneck_forward.1} parent=11 // pred_check
        %p427 = pneg %p180
      $region30: #{bottleneck_forward.1} parent=11 // pred_check_branch
        %429 = sbr.rel (%p427) target = $region32
      $region31: #{bottleneck_forward.1} parent=11 // pred_region
        _
      $region32: #{bottleneck_forward.1} parent=11 // pred_fallthru
        _
      // Predicated region
      $region33: #{bottleneck_forward.1} parent=11 // pred_check
        %p430 = pneg %p201
      $region34: #{bottleneck_forward.1} parent=11 // pred_check_branch
        %432 = sbr.rel (%p430) target = $region36
      $region35: #{bottleneck_forward.1} parent=11 // pred_region
        _
      $region36: #{bottleneck_forward.1} parent=11 // pred_fallthru
        _
      // Predicated region
      $region37: #{bottleneck_forward.1} parent=11 // pred_check
        %p433 = pneg %p222
      $region38: #{bottleneck_forward.1} parent=11 // pred_check_branch
        %435 = sbr.rel (%p433) target = $region40
      $region39: #{bottleneck_forward.1} parent=11 // pred_region
        _
      $region40: #{bottleneck_forward.1} parent=11 // pred_fallthru
        _
      // Predicated region
      $region41: #{bottleneck_forward.1} parent=11 // pred_check
        %p436 = pneg %p243
      $region42: #{bottleneck_forward.1} parent=11 // pred_check_branch
        %438 = sbr.rel (%p436) target = $region44
      $region43: #{bottleneck_forward.1} parent=11 // pred_region
        _
      $region44: #{bottleneck_forward.1} parent=11 // pred_fallthru
        _
      // Predicated region
      $region45: #{bottleneck_forward.1} parent=11 // pred_check
        %p439 = pneg %p264
      $region46: #{bottleneck_forward.1} parent=11 // pred_check_branch
        %441 = sbr.rel (%p439) target = $region48
      $region47: #{bottleneck_forward.1} parent=11 // pred_region
        _
      $region48: #{bottleneck_forward.1} parent=11 // pred_fallthru
        _
      // Predicated region
      $region49: #{bottleneck_forward.1} parent=11 // pred_check
        %p442 = pneg %p285
      $region50: #{bottleneck_forward.1} parent=11 // pred_check_branch
        %444 = sbr.rel (%p442) target = $region52
      $region51: #{bottleneck_forward.1} parent=11 // pred_region
        _
      $region52: #{bottleneck_forward.1} parent=11 // pred_fallthru
        _
      // Predicated region
      $region53: #{bottleneck_forward.1} parent=11 // pred_check
        %p445 = pneg %p306
      $region54: #{bottleneck_forward.1} parent=11 // pred_check_branch
        %447 = sbr.rel (%p445) target = $region56
      $region55: #{bottleneck_forward.1} parent=11 // pred_region
        _
      $region56: #{bottleneck_forward.1} parent=11 // pred_fallthru
        _
      // Predicated region
      $region57: #{bottleneck_forward.1} parent=11 // pred_check
        %p448 = pneg %p327
      $region58: #{bottleneck_forward.1} parent=11 // pred_check_branch
        %450 = sbr.rel (%p448) target = $region60
      $region59: #{bottleneck_forward.1} parent=11 // pred_region
        _
      $region60: #{bottleneck_forward.1} parent=11 // pred_fallthru
        _
      // Predicated region
      $region61: #{bottleneck_forward.1} parent=11 // pred_check
        %p451 = pneg %p348
      $region62: #{bottleneck_forward.1} parent=11 // pred_check_branch
        %453 = sbr.rel (%p451) target = $region64
      $region63: #{bottleneck_forward.1} parent=11 // pred_region
        _
      $region64: #{bottleneck_forward.1} parent=11 // pred_fallthru
        _
    $region12: #{bottleneck_forward.1} parent=5 // pred_fallthru
      _
    %p454 = scmp.lt.s32.totalorder %s23, 2
    // Predicated region
    $region65: #{bottleneck_forward.1} parent=5 // pred_check
      %p455 = pneg %p454
    $region66: #{bottleneck_forward.1} parent=5 // pred_check_branch
      %457 = sbr.rel (%p455) target = $region68
    $region67: #{bottleneck_forward.1} parent=5 // pred_region
      // Predicated region
      $region69: #{bottleneck_forward.1} parent=67 // pred_check
        %p458 = pneg %p43
      $region70: #{bottleneck_forward.1} parent=67 // pred_check_branch
        %460 = sbr.rel (%p458) target = $region72
      $region71: #{bottleneck_forward.1} parent=67 // pred_region
        %p461 = scmp.lt.s32.totalorder %s23, 1
        %s462 = scalar_select %p461, %s23, 1
        %s463 = smul.addr %s462, 4
        %s464 = smul.addr %s463, 8
        %s465 = scalar_lea.vmem %s0, %s464
      $region72: #{bottleneck_forward.1} parent=67 // pred_fallthru
        _
      // Predicated region
      $region73: #{bottleneck_forward.1} parent=67 // pred_check
        %p466 = pneg %p69
      $region74: #{bottleneck_forward.1} parent=67 // pred_check_branch
        %468 = sbr.rel (%p466) target = $region76
      $region75: #{bottleneck_forward.1} parent=67 // pred_region
        %p469 = scmp.lt.s32.totalorder %s23, 1
        %s470 = scalar_select %p469, %s23, 1
        %s471 = smul.addr %s470, 4
        %s472 = smul.addr %s471, 8
        %s473 = scalar_lea.vmem %s1, %s472
      $region76: #{bottleneck_forward.1} parent=67 // pred_fallthru
        _
    $region68: #{bottleneck_forward.1} parent=5 // pred_fallthru
      _
    %p474 = scmp.le.s32.totalorder 1, %s23
    %p475 = scmp.lt.s32.totalorder %s23, 3
    %p476 = pnand %p474, %p475
    %p477 = pneg %p476
    // Predicated region
    $region77: #{bottleneck_forward.1} parent=5 // pred_check
      _
    $region78: #{bottleneck_forward.1} parent=5 // pred_check_branch
      %479 = sbr.rel (%p476) target = $region80
    $region79: #{bottleneck_forward.1} parent=5 // pred_region
      %s480 = ssub.s32 %s23, 1
      %p481 = scmp.lt.s32.totalorder %s28, 1
      %s482 = scalar_select %p481, %s28, 1
      %s483 = smul.addr %s482, 4
      %s484 = smul.addr %s483, 8
      %s485 = scalar_lea.vmem %s0, %s484
      %p486 = pneg %p49
      %p487 = pneg %p46
      %p488 = scmp.lt.s32.totalorder %s28, 1
      %s489 = scalar_select %p488, %s28, 1
      %s490 = smul.addr %s489, 4
      %s491 = smul.addr %s490, 8
      %s492 = scalar_lea.vmem %s1, %s491
      %p493 = pneg %p75
      %p494 = pneg %p72
      %p495 = pneg %p96
      %p496 = pneg %p93
      %p497 = pneg %p117
      %p498 = pneg %p114
      %p499 = pneg %p138
      %p500 = pneg %p135
      %p501 = pneg %p159
      %p502 = pneg %p156
      %p503 = pneg %p180
      %p504 = pneg %p177
      %p505 = pneg %p201
      %p506 = pneg %p198
      %p507 = pneg %p222
      %p508 = pneg %p219
      %p509 = pneg %p243
      %p510 = pneg %p240
      %p511 = pneg %p264
      %p512 = pneg %p261
      %p513 = pneg %p285
      %p514 = pneg %p282
      %p515 = pneg %p306
      %p516 = pneg %p303
      %p517 = pneg %p327
      %p518 = pneg %p324
      %p519 = pneg %p348
      %p520 = pneg %p345
      %p521 = pneg %p374
      %p522 = pneg %p371
      %p523 = scmp.lt.s32.totalorder %s28, 1
      %s524 = scalar_select %p523, %s28, 1
      %s525 = smul.addr %s524, 4
      %s526 = smul.addr %s525, 8
      %s527 = scalar_lea.vmem %s15, %s526
      %p528 = pneg %p400
      %p529 = pneg %p397
      %p530 = scmp.lt.s32.totalorder %s28, 1
      %s531 = scalar_select %p530, %s28, 1
      %s532 = smul.addr %s531, 4
      %s533 = smul.addr %s532, 8
      %s534 = scalar_lea.vmem %s16, %s533
      %p535 = scmp.lt.s32.totalorder %s28, 1
      %s536 = scalar_select %p535, %s28, 1
      %s537 = smul.addr %s536, 4
      %s538 = smul.addr %s537, 8
      %s539 = scalar_lea.vmem %s0, %s538
      %p540 = scmp.lt.s32.totalorder %s28, 1
      %s541 = scalar_select %p540, %s28, 1
      %s542 = smul.addr %s541, 4
      %s543 = smul.addr %s542, 8
      %s544 = scalar_lea.vmem %s1, %s543
      %p545 = scmp.lt.s32.totalorder %s28, 1
      %s546 = scalar_select %p545, %s28, 1
      %s547 = smul.addr %s546, 4
      %s548 = smul.addr %s547, 8
      %s549 = scalar_lea.vmem %s15, %s548
      %p550 = scmp.lt.s32.totalorder %s28, 1
      %s551 = scalar_select %p550, %s28, 1
      %s552 = smul.addr %s551, 4
      %s553 = smul.addr %s552, 8
      %s554 = scalar_lea.vmem %s16, %s553
      %v556 = vld [vmem:[%s539] sm:$0xff]
      %v557 = vld [vmem:[%s539 + $0x8] sm:$0xff]
      %v558 = vld [vmem:[%s539 + $0x10] sm:$0xff]
      %v559 = vld [vmem:[%s539 + $0x18] sm:$0xff]
      %v560 = vld [vmem:[%s3] sm:$0x3]
      %v561 = vpack.c.bf16 %v558, %v556
      %v562 = vpack.c.bf16 %v559, %v557
      %vm563 = vcmask 130048
      %v565 = vsel %vm563, %v560, 0
      %567 = vmatprep.subr.bf16.mxu0 %v562
      %568 = vmatpush1.bf16.msra.mxu0 %v561
      %569 = vmatprep.subr.bf16.mxu0 0
      %570 = vmatpush1.bf16.msra.mxu0 0
      %571 = vmatprep.subr.bf16.mxu0 0
      %572 = vmatpush1.bf16.msra.mxu0 0
      %573 = vmatprep.subr.bf16.mxu0 0
      %574 = vmatpush1.bf16.msra.mxu0 0
      %575 = vmatprep.subr.bf16.mxu0 0
      %576 = vmatpush1.bf16.msra.mxu0 0
      %577 = vmatprep.subr.bf16.mxu0 0
      %578 = vmatpush1.bf16.msra.mxu0 0
      %579 = vmatprep.subr.bf16.mxu0 0
      %580 = vmatpush1.bf16.msra.mxu0 0
      %581 = vmatprep.subr.bf16.mxu0 0
      %582 = vmatpush1.bf16.msra.mxu0 0
      %583 = vmatprep.subr.bf16.mxu0 0
      %584 = vmatpush1.bf16.msra.mxu0 0
      %585 = vmatprep.subr.bf16.mxu0 0
      %586 = vmatpush1.bf16.msra.mxu0 0
      %587 = vmatprep.subr.bf16.mxu0 0
      %588 = vmatpush1.bf16.msra.mxu0 0
      %589 = vmatprep.subr.bf16.mxu0 0
      %590 = vmatpush1.bf16.msra.mxu0 0
      %591 = vmatprep.subr.bf16.mxu0 0
      %592 = vmatpush1.bf16.msra.mxu0 0
      %593 = vmatprep.subr.bf16.mxu0 0
      %594 = vmatpush1.bf16.msra.mxu0 0
      %595 = vmatprep.subr.bf16.mxu0 0
      %596 = vmatpush1.bf16.msra.mxu0 0
      %597 = vmatprep.subr.bf16.mxu0 0
      %598 = vmatpush1.bf16.msra.mxu0 0
      %599 = vmatprep.mubr.bf16.mxu0 0
      %600 = vmatmul.mubr.bf16.gmra.mrb[0].mxu0 %v565
      %v601 = vpop.f32.mrb[0].mxu0
      %v602 = vadd.f32 0.0, %v601
      %v603 = vpop.f32.mrb[0].mxu0
      %v604 = vadd.f32 0.0, %v603
      %v605 = vpop.f32.mrb[0].mxu0
      %v606 = vpop.f32.mrb[0].mxu0
      %607 = vdwg.mxu0
      %v608 = vld [vmem:[%s4] sm:$0xf]
      %610 = vset.pattern.permute.xlu0 0
      %611 = vperm.xlu0 %610, %v608
      %v612 = vpop.permute.xlu0 %611
      %v614 = vmul.f32 %v602, %v612
      %v615 = vmul.f32 %v604, %v612
      %v616 = vld [vmem:[%s5] sm:$0xf]
      %618 = vset.pattern.permute.xlu0 0
      %619 = vperm.xlu0 %618, %v616
      %v620 = vpop.permute.xlu0 %619
      %v622 = vadd.f32 %v614, %v620
      %v623 = vadd.f32 %v615, %v620
      %v624 = vmax.f32 %v622, 0.0
      %v625 = vmax.f32 %v623, 0.0
      %v626 = vmin.f32 %v624, 1.0
      %v627 = vmin.f32 %v625, 1.0
      %v628 = vmul.f32 %v626, 15.0
      %v629 = vmul.f32 %v627, 15.0
      %v630 = vround.ne.pseudo %v628
      %v631 = vround.ne.pseudo %v629
      %v632 = vrcp.pop 15.0
      %v633 = vmul.f32 %v630, %v632
      %v634 = vmul.f32 %v631, %v632
      %635 = vrot.lane.b32.xlu0 %v633, 17
      %v636 = vpop.permute.xlu0 %635
      %637 = vrot.lane.b32.xlu0 %v634, 17
      %v638 = vpop.permute.xlu0 %637
      %v639 = vlaneseq
      %v640 = vand.u32 %v639, 127
      %vm641 = vcmp.lt.s32.totalorder %v640, 17
      %v642 = vsel %vm641, %v636, %v638
      %v643 = vsel %vm641, %v638, %v636
      %v644 = vld [vmem:[%s2] sm:$0x3]
      %v646 = vlaneseq
      %v647 = vshrl.u32 %v646, 7
      %v648 = vsub.s32 0, %v647
      %v649 = vrot.slane %v644, %v648
      %v650 = vlaneseq
      %v651 = vshrl.u32 %v650, 7
      %v652 = vsub.s32 1, %v651
      %v653 = vrot.slane %v644, %v652
      %v656 = vmul.f32 %v643, %v649
      %v657 = vmul.f32 %v642, %v653
      %v658 = vld [vmem:[%s6] sm:$0x3]
      %v659 = vpack.c.bf16 %v656, %v656
      %v660 = vpack.c.bf16 %v657, %v657
      %661 = vrot.lane.b32.xlu0 %v633, 16
      %v662 = vpop.permute.xlu0 %661
      %663 = vrot.lane.b32.xlu0 %v634, 16
      %v664 = vpop.permute.xlu0 %663
      %vm665 = vcmp.lt.s32.totalorder %v640, 16
      %v666 = vsel %vm665, %v662, %v664
      %v667 = vsel %vm665, %v664, %v662
      %s668 = scalar_lea.vmem %s2, 2
      %v669 = vld [vmem:[%s668] sm:$0x3]
      %v671 = vlaneseq
      %v672 = vshrl.u32 %v671, 7
      %v673 = vsub.s32 0, %v672
      %v674 = vrot.slane %v669, %v673
      %v675 = vlaneseq
      %v676 = vshrl.u32 %v675, 7
      %v677 = vsub.s32 1, %v676
      %v678 = vrot.slane %v669, %v677
      %v681 = vmul.f32 %v667, %v674
      %v682 = vmul.f32 %v666, %v678
      %s683 = scalar_lea.vmem %s6, 2
      %v684 = vld [vmem:[%s683] sm:$0x3]
      %v685 = vpack.c.bf16 %v681, %v681
      %v686 = vpack.c.bf16 %v682, %v682
      %vm687 = vcmask 31744
      %v689 = vsel %vm687, %v684, 0
      %vm691 = vcmask 1041408
      %v693 = vsel %vm691, %v685, 0
      %v696 = vsel %vm691, %v686, 0
      %698 = vmatprep.subr.bf16.mxu0 %v696
      %699 = vmatpush1.bf16.msra.mxu0 %v693
      %700 = vmatprep.subr.bf16.mxu0 0
      %701 = vmatpush1.bf16.msra.mxu0 0
      %702 = vmatprep.subr.bf16.mxu0 0
      %703 = vmatpush1.bf16.msra.mxu0 0
      %704 = vmatprep.subr.bf16.mxu0 0
      %705 = vmatpush1.bf16.msra.mxu0 0
      %706 = vmatprep.subr.bf16.mxu0 0
      %707 = vmatpush1.bf16.msra.mxu0 0
      %708 = vmatprep.subr.bf16.mxu0 0
      %709 = vmatpush1.bf16.msra.mxu0 0
      %710 = vmatprep.subr.bf16.mxu0 0
      %711 = vmatpush1.bf16.msra.mxu0 0
      %712 = vmatprep.subr.bf16.mxu0 0
      %713 = vmatpush1.bf16.msra.mxu0 0
      %714 = vmatprep.subr.bf16.mxu0 0
      %715 = vmatpush1.bf16.msra.mxu0 0
      %716 = vmatprep.subr.bf16.mxu0 0
      %717 = vmatpush1.bf16.msra.mxu0 0
      %718 = vmatprep.subr.bf16.mxu0 0
      %719 = vmatpush1.bf16.msra.mxu0 0
      %720 = vmatprep.subr.bf16.mxu0 0
      %721 = vmatpush1.bf16.msra.mxu0 0
      %722 = vmatprep.subr.bf16.mxu0 0
      %723 = vmatpush1.bf16.msra.mxu0 0
      %724 = vmatprep.subr.bf16.mxu0 0
      %725 = vmatpush1.bf16.msra.mxu0 0
      %726 = vmatprep.subr.bf16.mxu0 0
      %727 = vmatpush1.bf16.msra.mxu0 0
      %728 = vmatprep.subr.bf16.mxu0 0
      %729 = vmatpush1.bf16.msra.mxu0 0
      %730 = vmatprep.mubr.bf16.mxu0 0
      %731 = vmatmul.mubr.bf16.gmra.mrb[0].mxu0 %v689
      %v732 = vpop.f32.mrb[0].mxu0
      %v733 = vadd.f32 0.0, %v732
      %v734 = vpop.f32.mrb[0].mxu0
      %v735 = vadd.f32 0.0, %v734
      %v736 = vpop.f32.mrb[0].mxu0
      %v737 = vpop.f32.mrb[0].mxu0
      %738 = vdwg.mxu0
      %v740 = vsel %vm687, %v658, 0
      %v743 = vsel %vm691, %v659, 0
      %v746 = vsel %vm691, %v660, 0
      %748 = vmatprep.subr.bf16.mxu0 %v746
      %749 = vmatpush1.bf16.msra.mxu0 %v743
      %750 = vmatprep.subr.bf16.mxu0 0
      %751 = vmatpush1.bf16.msra.mxu0 0
      %752 = vmatprep.subr.bf16.mxu0 0
      %753 = vmatpush1.bf16.msra.mxu0 0
      %754 = vmatprep.subr.bf16.mxu0 0
      %755 = vmatpush1.bf16.msra.mxu0 0
      %756 = vmatprep.subr.bf16.mxu0 0
      %757 = vmatpush1.bf16.msra.mxu0 0
      %758 = vmatprep.subr.bf16.mxu0 0
      %759 = vmatpush1.bf16.msra.mxu0 0
      %760 = vmatprep.subr.bf16.mxu0 0
      %761 = vmatpush1.bf16.msra.mxu0 0
      %762 = vmatprep.subr.bf16.mxu0 0
      %763 = vmatpush1.bf16.msra.mxu0 0
      %764 = vmatprep.subr.bf16.mxu0 0
      %765 = vmatpush1.bf16.msra.mxu0 0
      %766 = vmatprep.subr.bf16.mxu0 0
      %767 = vmatpush1.bf16.msra.mxu0 0
      %768 = vmatprep.subr.bf16.mxu0 0
      %769 = vmatpush1.bf16.msra.mxu0 0
      %770 = vmatprep.subr.bf16.mxu0 0
      %771 = vmatpush1.bf16.msra.mxu0 0
      %772 = vmatprep.subr.bf16.mxu0 0
      %773 = vmatpush1.bf16.msra.mxu0 0
      %774 = vmatprep.subr.bf16.mxu0 0
      %775 = vmatpush1.bf16.msra.mxu0 0
      %776 = vmatprep.subr.bf16.mxu0 0
      %777 = vmatpush1.bf16.msra.mxu0 0
      %778 = vmatprep.subr.bf16.mxu0 0
      %779 = vmatpush1.bf16.msra.mxu0 0
      %780 = vmatprep.mubr.bf16.mxu0 0
      %781 = vmatmul.mubr.bf16.gmra.mrb[0].mxu0 %v740
      %v782 = vpop.f32.mrb[0].mxu0
      %v783 = vadd.f32 %v733, %v782
      %v784 = vpop.f32.mrb[0].mxu0
      %v785 = vadd.f32 %v735, %v784
      %v786 = vpop.f32.mrb[0].mxu0
      %v787 = vpop.f32.mrb[0].mxu0
      %788 = vdwg.mxu0
      %789 = vrot.lane.b32.xlu0 %v633, 15
      %v790 = vpop.permute.xlu0 %789
      %791 = vrot.lane.b32.xlu0 %v634, 15
      %v792 = vpop.permute.xlu0 %791
      %vm793 = vcmp.lt.s32.totalorder %v640, 15
      %v794 = vsel %vm793, %v790, %v792
      %v795 = vsel %vm793, %v792, %v790
      %s796 = scalar_lea.vmem %s2, 4
      %v797 = vld [vmem:[%s796] sm:$0x3]
      %v799 = vlaneseq
      %v800 = vshrl.u32 %v799, 7
      %v801 = vsub.s32 0, %v800
      %v802 = vrot.slane %v797, %v801
      %v803 = vlaneseq
      %v804 = vshrl.u32 %v803, 7
      %v805 = vsub.s32 1, %v804
      %v806 = vrot.slane %v797, %v805
      %v809 = vmul.f32 %v795, %v802
      %v810 = vmul.f32 %v794, %v806
      %s811 = scalar_lea.vmem %s6, 4
      %v812 = vld [vmem:[%s811] sm:$0x3]
      %v813 = vpack.c.bf16 %v809, %v809
      %v814 = vpack.c.bf16 %v810, %v810
      %v816 = vsel %vm687, %v812, 0
      %v819 = vsel %vm691, %v813, 0
      %v822 = vsel %vm691, %v814, 0
      %824 = vmatprep.subr.bf16.mxu0 %v822
      %825 = vmatpush1.bf16.msra.mxu0 %v819
      %826 = vmatprep.subr.bf16.mxu0 0
      %827 = vmatpush1.bf16.msra.mxu0 0
      %828 = vmatprep.subr.bf16.mxu0 0
      %829 = vmatpush1.bf16.msra.mxu0 0
      %830 = vmatprep.subr.bf16.mxu0 0
      %831 = vmatpush1.bf16.msra.mxu0 0
      %832 = vmatprep.subr.bf16.mxu0 0
      %833 = vmatpush1.bf16.msra.mxu0 0
      %834 = vmatprep.subr.bf16.mxu0 0
      %835 = vmatpush1.bf16.msra.mxu0 0
      %836 = vmatprep.subr.bf16.mxu0 0
      %837 = vmatpush1.bf16.msra.mxu0 0
      %838 = vmatprep.subr.bf16.mxu0 0
      %839 = vmatpush1.bf16.msra.mxu0 0
      %840 = vmatprep.subr.bf16.mxu0 0
      %841 = vmatpush1.bf16.msra.mxu0 0
      %842 = vmatprep.subr.bf16.mxu0 0
      %843 = vmatpush1.bf16.msra.mxu0 0
      %844 = vmatprep.subr.bf16.mxu0 0
      %845 = vmatpush1.bf16.msra.mxu0 0
      %846 = vmatprep.subr.bf16.mxu0 0
      %847 = vmatpush1.bf16.msra.mxu0 0
      %848 = vmatprep.subr.bf16.mxu0 0
      %849 = vmatpush1.bf16.msra.mxu0 0
      %850 = vmatprep.subr.bf16.mxu0 0
      %851 = vmatpush1.bf16.msra.mxu0 0
      %852 = vmatprep.subr.bf16.mxu0 0
      %853 = vmatpush1.bf16.msra.mxu0 0
      %854 = vmatprep.subr.bf16.mxu0 0
      %855 = vmatpush1.bf16.msra.mxu0 0
      %856 = vmatprep.mubr.bf16.mxu0 0
      %857 = vmatmul.mubr.bf16.gmra.mrb[0].mxu0 %v816
      %v858 = vpop.f32.mrb[0].mxu0
      %v859 = vadd.f32 0.0, %v858
      %v860 = vpop.f32.mrb[0].mxu0
      %v861 = vadd.f32 0.0, %v860
      %v862 = vpop.f32.mrb[0].mxu0
      %v863 = vpop.f32.mrb[0].mxu0
      %864 = vdwg.mxu0
      %v865 = vadd.f32 %v783, %v859
      %v866 = vadd.f32 %v785, %v861
      %867 = vrot.lane.b32.xlu0 %v633, 1
      %v868 = vpop.permute.xlu0 %867
      %869 = vrot.lane.b32.xlu0 %v634, 1
      %v870 = vpop.permute.xlu0 %869
      %vm871 = vcmp.lt.s32.totalorder %v640, 1
      %v872 = vsel %vm871, %v868, %v870
      %v873 = vsel %vm871, %v870, %v868
      %s874 = scalar_lea.vmem %s2, 6
      %v875 = vld [vmem:[%s874] sm:$0x3]
      %v877 = vlaneseq
      %v878 = vshrl.u32 %v877, 7
      %v879 = vsub.s32 0, %v878
      %v880 = vrot.slane %v875, %v879
      %v881 = vlaneseq
      %v882 = vshrl.u32 %v881, 7
      %v883 = vsub.s32 1, %v882
      %v884 = vrot.slane %v875, %v883
      %v887 = vmul.f32 %v873, %v880
      %v888 = vmul.f32 %v872, %v884
      %s889 = scalar_lea.vmem %s6, 6
      %v890 = vld [vmem:[%s889] sm:$0x3]
      %v891 = vpack.c.bf16 %v887, %v887
      %v892 = vpack.c.bf16 %v888, %v888
      %v894 = vsel %vm687, %v890, 0
      %v897 = vsel %vm691, %v891, 0
      %v900 = vsel %vm691, %v892, 0
      %902 = vmatprep.subr.bf16.mxu0 %v900
      %903 = vmatpush1.bf16.msra.mxu0 %v897
      %904 = vmatprep.subr.bf16.mxu0 0
      %905 = vmatpush1.bf16.msra.mxu0 0
      %906 = vmatprep.subr.bf16.mxu0 0
      %907 = vmatpush1.bf16.msra.mxu0 0
      %908 = vmatprep.subr.bf16.mxu0 0
      %909 = vmatpush1.bf16.msra.mxu0 0
      %910 = vmatprep.subr.bf16.mxu0 0
      %911 = vmatpush1.bf16.msra.mxu0 0
      %912 = vmatprep.subr.bf16.mxu0 0
      %913 = vmatpush1.bf16.msra.mxu0 0
      %914 = vmatprep.subr.bf16.mxu0 0
      %915 = vmatpush1.bf16.msra.mxu0 0
      %916 = vmatprep.subr.bf16.mxu0 0
      %917 = vmatpush1.bf16.msra.mxu0 0
      %918 = vmatprep.subr.bf16.mxu0 0
      %919 = vmatpush1.bf16.msra.mxu0 0
      %920 = vmatprep.subr.bf16.mxu0 0
      %921 = vmatpush1.bf16.msra.mxu0 0
      %922 = vmatprep.subr.bf16.mxu0 0
      %923 = vmatpush1.bf16.msra.mxu0 0
      %924 = vmatprep.subr.bf16.mxu0 0
      %925 = vmatpush1.bf16.msra.mxu0 0
      %926 = vmatprep.subr.bf16.mxu0 0
      %927 = vmatpush1.bf16.msra.mxu0 0
      %928 = vmatprep.subr.bf16.mxu0 0
      %929 = vmatpush1.bf16.msra.mxu0 0
      %930 = vmatprep.subr.bf16.mxu0 0
      %931 = vmatpush1.bf16.msra.mxu0 0
      %932 = vmatprep.subr.bf16.mxu0 0
      %933 = vmatpush1.bf16.msra.mxu0 0
      %934 = vmatprep.mubr.bf16.mxu0 0
      %935 = vmatmul.mubr.bf16.gmra.mrb[0].mxu0 %v894
      %v936 = vpop.f32.mrb[0].mxu0
      %v937 = vadd.f32 0.0, %v936
      %v938 = vpop.f32.mrb[0].mxu0
      %v939 = vadd.f32 0.0, %v938
      %v940 = vpop.f32.mrb[0].mxu0
      %v941 = vpop.f32.mrb[0].mxu0
      %942 = vdwg.mxu0
      %v943 = vadd.f32 %v865, %v937
      %v944 = vadd.f32 %v866, %v939
      %s945 = scalar_lea.vmem %s6, 8
      %v946 = vld [vmem:[%s945] sm:$0x3]
      %v947 = vpack.c.bf16 %v633, %v633
      %v948 = vpack.c.bf16 %v634, %v634
      %v950 = vsel %vm687, %v946, 0
      %v953 = vsel %vm691, %v947, 0
      %v956 = vsel %vm691, %v948, 0
      %958 = vmatprep.subr.bf16.mxu0 %v956
      %959 = vmatpush1.bf16.msra.mxu0 %v953
      %960 = vmatprep.subr.bf16.mxu0 0
      %961 = vmatpush1.bf16.msra.mxu0 0
      %962 = vmatprep.subr.bf16.mxu0 0
      %963 = vmatpush1.bf16.msra.mxu0 0
      %964 = vmatprep.subr.bf16.mxu0 0
      %965 = vmatpush1.bf16.msra.mxu0 0
      %966 = vmatprep.subr.bf16.mxu0 0
      %967 = vmatpush1.bf16.msra.mxu0 0
      %968 = vmatprep.subr.bf16.mxu0 0
      %969 = vmatpush1.bf16.msra.mxu0 0
      %970 = vmatprep.subr.bf16.mxu0 0
      %971 = vmatpush1.bf16.msra.mxu0 0
      %972 = vmatprep.subr.bf16.mxu0 0
      %973 = vmatpush1.bf16.msra.mxu0 0
      %974 = vmatprep.subr.bf16.mxu0 0
      %975 = vmatpush1.bf16.msra.mxu0 0
      %976 = vmatprep.subr.bf16.mxu0 0
      %977 = vmatpush1.bf16.msra.mxu0 0
      %978 = vmatprep.subr.bf16.mxu0 0
      %979 = vmatpush1.bf16.msra.mxu0 0
      %980 = vmatprep.subr.bf16.mxu0 0
      %981 = vmatpush1.bf16.msra.mxu0 0
      %982 = vmatprep.subr.bf16.mxu0 0
      %983 = vmatpush1.bf16.msra.mxu0 0
      %984 = vmatprep.subr.bf16.mxu0 0
      %985 = vmatpush1.bf16.msra.mxu0 0
      %986 = vmatprep.subr.bf16.mxu0 0
      %987 = vmatpush1.bf16.msra.mxu0 0
      %988 = vmatprep.subr.bf16.mxu0 0
      %989 = vmatpush1.bf16.msra.mxu0 0
      %990 = vmatprep.mubr.bf16.mxu0 0
      %991 = vmatmul.mubr.bf16.gmra.mrb[0].mxu0 %v950
      %v992 = vpop.f32.mrb[0].mxu0
      %v993 = vadd.f32 0.0, %v992
      %v994 = vpop.f32.mrb[0].mxu0
      %v995 = vadd.f32 0.0, %v994
      %v996 = vpop.f32.mrb[0].mxu0
      %v997 = vpop.f32.mrb[0].mxu0
      %998 = vdwg.mxu0
      %v999 = vadd.f32 %v943, %v993
      %v1000 = vadd.f32 %v944, %v995
      %1001 = vrot.lane.b32.xlu0 %v633, 127
      %v1002 = vpop.permute.xlu0 %1001
      %1003 = vrot.lane.b32.xlu0 %v634, 127
      %v1004 = vpop.permute.xlu0 %1003
      %vm1005 = vcmp.lt.s32.totalorder %v640, 127
      %v1006 = vsel %vm1005, %v1002, %v1004
      %v1007 = vsel %vm1005, %v1004, %v1002
      %s1008 = scalar_lea.vmem %s2, 10
      %v1009 = vld [vmem:[%s1008] sm:$0x3]
      %v1011 = vlaneseq
      %v1012 = vshrl.u32 %v1011, 7
      %v1013 = vsub.s32 0, %v1012
      %v1014 = vrot.slane %v1009, %v1013
      %v1015 = vlaneseq
      %v1016 = vshrl.u32 %v1015, 7
      %v1017 = vsub.s32 1, %v1016
      %v1018 = vrot.slane %v1009, %v1017
      %v1021 = vmul.f32 %v1006, %v1014
      %v1022 = vmul.f32 %v1007, %v1018
      %s1023 = scalar_lea.vmem %s6, 10
      %v1024 = vld [vmem:[%s1023] sm:$0x3]
      %v1025 = vpack.c.bf16 %v1021, %v1021
      %v1026 = vpack.c.bf16 %v1022, %v1022
      %v1028 = vsel %vm687, %v1024, 0
      %v1031 = vsel %vm691, %v1025, 0
      %v1034 = vsel %vm691, %v1026, 0
      %1036 = vmatprep.subr.bf16.mxu0 %v1034
      %1037 = vmatpush1.bf16.msra.mxu0 %v1031
      %1038 = vmatprep.subr.bf16.mxu0 0
      %1039 = vmatpush1.bf16.msra.mxu0 0
      %1040 = vmatprep.subr.bf16.mxu0 0
      %1041 = vmatpush1.bf16.msra.mxu0 0
      %1042 = vmatprep.subr.bf16.mxu0 0
      %1043 = vmatpush1.bf16.msra.mxu0 0
      %1044 = vmatprep.subr.bf16.mxu0 0
      %1045 = vmatpush1.bf16.msra.mxu0 0
      %1046 = vmatprep.subr.bf16.mxu0 0
      %1047 = vmatpush1.bf16.msra.mxu0 0
      %1048 = vmatprep.subr.bf16.mxu0 0
      %1049 = vmatpush1.bf16.msra.mxu0 0
      %1050 = vmatprep.subr.bf16.mxu0 0
      %1051 = vmatpush1.bf16.msra.mxu0 0
      %1052 = vmatprep.subr.bf16.mxu0 0
      %1053 = vmatpush1.bf16.msra.mxu0 0
      %1054 = vmatprep.subr.bf16.mxu0 0
      %1055 = vmatpush1.bf16.msra.mxu0 0
      %1056 = vmatprep.subr.bf16.mxu0 0
      %1057 = vmatpush1.bf16.msra.mxu0 0
      %1058 = vmatprep.subr.bf16.mxu0 0
      %1059 = vmatpush1.bf16.msra.mxu0 0
      %1060 = vmatprep.subr.bf16.mxu0 0
      %1061 = vmatpush1.bf16.msra.mxu0 0
      %1062 = vmatprep.subr.bf16.mxu0 0
      %1063 = vmatpush1.bf16.msra.mxu0 0
      %1064 = vmatprep.subr.bf16.mxu0 0
      %1065 = vmatpush1.bf16.msra.mxu0 0
      %1066 = vmatprep.subr.bf16.mxu0 0
      %1067 = vmatpush1.bf16.msra.mxu0 0
      %1068 = vmatprep.mubr.bf16.mxu0 0
      %1069 = vmatmul.mubr.bf16.gmra.mrb[0].mxu0 %v1028
      %v1070 = vpop.f32.mrb[0].mxu0
      %v1071 = vadd.f32 0.0, %v1070
      %v1072 = vpop.f32.mrb[0].mxu0
      %v1073 = vadd.f32 0.0, %v1072
      %v1074 = vpop.f32.mrb[0].mxu0
      %v1075 = vpop.f32.mrb[0].mxu0
      %1076 = vdwg.mxu0
      %v1077 = vadd.f32 %v999, %v1071
      %v1078 = vadd.f32 %v1000, %v1073
      %1079 = vrot.lane.b32.xlu0 %v633, 113
      %v1080 = vpop.permute.xlu0 %1079
      %1081 = vrot.lane.b32.xlu0 %v634, 113
      %v1082 = vpop.permute.xlu0 %1081
      %vm1083 = vcmp.lt.s32.totalorder %v640, 113
      %v1084 = vsel %vm1083, %v1080, %v1082
      %v1085 = vsel %vm1083, %v1082, %v1080
      %s1086 = scalar_lea.vmem %s2, 12
      %v1087 = vld [vmem:[%s1086] sm:$0x3]
      %v1089 = vlaneseq
      %v1090 = vshrl.u32 %v1089, 7
      %v1091 = vsub.s32 0, %v1090
      %v1092 = vrot.slane %v1087, %v1091
      %v1093 = vlaneseq
      %v1094 = vshrl.u32 %v1093, 7
      %v1095 = vsub.s32 1, %v1094
      %v1096 = vrot.slane %v1087, %v1095
      %v1099 = vmul.f32 %v1084, %v1092
      %v1100 = vmul.f32 %v1085, %v1096
      %s1101 = scalar_lea.vmem %s6, 12
      %v1102 = vld [vmem:[%s1101] sm:$0x3]
      %v1103 = vpack.c.bf16 %v1099, %v1099
      %v1104 = vpack.c.bf16 %v1100, %v1100
      %v1106 = vsel %vm687, %v1102, 0
      %v1109 = vsel %vm691, %v1103, 0
      %v1112 = vsel %vm691, %v1104, 0
      %1114 = vmatprep.subr.bf16.mxu0 %v1112
      %1115 = vmatpush1.bf16.msra.mxu0 %v1109
      %1116 = vmatprep.subr.bf16.mxu0 0
      %1117 = vmatpush1.bf16.msra.mxu0 0
      %1118 = vmatprep.subr.bf16.mxu0 0
      %1119 = vmatpush1.bf16.msra.mxu0 0
      %1120 = vmatprep.subr.bf16.mxu0 0
      %1121 = vmatpush1.bf16.msra.mxu0 0
      %1122 = vmatprep.subr.bf16.mxu0 0
      %1123 = vmatpush1.bf16.msra.mxu0 0
      %1124 = vmatprep.subr.bf16.mxu0 0
      %1125 = vmatpush1.bf16.msra.mxu0 0
      %1126 = vmatprep.subr.bf16.mxu0 0
      %1127 = vmatpush1.bf16.msra.mxu0 0
      %1128 = vmatprep.subr.bf16.mxu0 0
      %1129 = vmatpush1.bf16.msra.mxu0 0
      %1130 = vmatprep.subr.bf16.mxu0 0
      %1131 = vmatpush1.bf16.msra.mxu0 0
      %1132 = vmatprep.subr.bf16.mxu0 0
      %1133 = vmatpush1.bf16.msra.mxu0 0
      %1134 = vmatprep.subr.bf16.mxu0 0
      %1135 = vmatpush1.bf16.msra.mxu0 0
      %1136 = vmatprep.subr.bf16.mxu0 0
      %1137 = vmatpush1.bf16.msra.mxu0 0
      %1138 = vmatprep.subr.bf16.mxu0 0
      %1139 = vmatpush1.bf16.msra.mxu0 0
      %1140 = vmatprep.subr.bf16.mxu0 0
      %1141 = vmatpush1.bf16.msra.mxu0 0
      %1142 = vmatprep.subr.bf16.mxu0 0
      %1143 = vmatpush1.bf16.msra.mxu0 0
      %1144 = vmatprep.subr.bf16.mxu0 0
      %1145 = vmatpush1.bf16.msra.mxu0 0
      %1146 = vmatprep.mubr.bf16.mxu0 0
      %1147 = vmatmul.mubr.bf16.gmra.mrb[0].mxu0 %v1106
      %v1148 = vpop.f32.mrb[0].mxu0
      %v1149 = vadd.f32 0.0, %v1148
      %v1150 = vpop.f32.mrb[0].mxu0
      %v1151 = vadd.f32 0.0, %v1150
      %v1152 = vpop.f32.mrb[0].mxu0
      %v1153 = vpop.f32.mrb[0].mxu0
      %1154 = vdwg.mxu0
      %v1155 = vadd.f32 %v1077, %v1149
      %v1156 = vadd.f32 %v1078, %v1151
      %1157 = vrot.lane.b32.xlu0 %v633, 112
      %v1158 = vpop.permute.xlu0 %1157
      %1159 = vrot.lane.b32.xlu0 %v634, 112
      %v1160 = vpop.permute.xlu0 %1159
      %vm1161 = vcmp.lt.s32.totalorder %v640, 112
      %v1162 = vsel %vm1161, %v1158, %v1160
      %v1163 = vsel %vm1161, %v1160, %v1158
      %s1164 = scalar_lea.vmem %s2, 14
      %v1165 = vld [vmem:[%s1164] sm:$0x3]
      %v1167 = vlaneseq
      %v1168 = vshrl.u32 %v1167, 7
      %v1169 = vsub.s32 0, %v1168
      %v1170 = vrot.slane %v1165, %v1169
      %v1171 = vlaneseq
      %v1172 = vshrl.u32 %v1171, 7
      %v1173 = vsub.s32 1, %v1172
      %v1174 = vrot.slane %v1165, %v1173
      %v1177 = vmul.f32 %v1162, %v1170
      %v1178 = vmul.f32 %v1163, %v1174
      %s1179 = scalar_lea.vmem %s6, 14
      %v1180 = vld [vmem:[%s1179] sm:$0x3]
      %v1181 = vpack.c.bf16 %v1177, %v1177
      %v1182 = vpack.c.bf16 %v1178, %v1178
      %v1184 = vsel %vm687, %v1180, 0
      %v1187 = vsel %vm691, %v1181, 0
      %v1190 = vsel %vm691, %v1182, 0
      %1192 = vmatprep.subr.bf16.mxu0 %v1190
      %1193 = vmatpush1.bf16.msra.mxu0 %v1187
      %1194 = vmatprep.subr.bf16.mxu0 0
      %1195 = vmatpush1.bf16.msra.mxu0 0
      %1196 = vmatprep.subr.bf16.mxu0 0
      %1197 = vmatpush1.bf16.msra.mxu0 0
      %1198 = vmatprep.subr.bf16.mxu0 0
      %1199 = vmatpush1.bf16.msra.mxu0 0
      %1200 = vmatprep.subr.bf16.mxu0 0
      %1201 = vmatpush1.bf16.msra.mxu0 0
      %1202 = vmatprep.subr.bf16.mxu0 0
      %1203 = vmatpush1.bf16.msra.mxu0 0
      %1204 = vmatprep.subr.bf16.mxu0 0
      %1205 = vmatpush1.bf16.msra.mxu0 0
      %1206 = vmatprep.subr.bf16.mxu0 0
      %1207 = vmatpush1.bf16.msra.mxu0 0
      %1208 = vmatprep.subr.bf16.mxu0 0
      %1209 = vmatpush1.bf16.msra.mxu0 0
      %1210 = vmatprep.subr.bf16.mxu0 0
      %1211 = vmatpush1.bf16.msra.mxu0 0
      %1212 = vmatprep.subr.bf16.mxu0 0
      %1213 = vmatpush1.bf16.msra.mxu0 0
      %1214 = vmatprep.subr.bf16.mxu0 0
      %1215 = vmatpush1.bf16.msra.mxu0 0
      %1216 = vmatprep.subr.bf16.mxu0 0
      %1217 = vmatpush1.bf16.msra.mxu0 0
      %1218 = vmatprep.subr.bf16.mxu0 0
      %1219 = vmatpush1.bf16.msra.mxu0 0
      %1220 = vmatprep.subr.bf16.mxu0 0
      %1221 = vmatpush1.bf16.msra.mxu0 0
      %1222 = vmatprep.subr.bf16.mxu0 0
      %1223 = vmatpush1.bf16.msra.mxu0 0
      %1224 = vmatprep.mubr.bf16.mxu0 0
      %1225 = vmatmul.mubr.bf16.gmra.mrb[0].mxu0 %v1184
      %v1226 = vpop.f32.mrb[0].mxu0
      %v1227 = vadd.f32 0.0, %v1226
      %v1228 = vpop.f32.mrb[0].mxu0
      %v1229 = vadd.f32 0.0, %v1228
      %v1230 = vpop.f32.mrb[0].mxu0
      %v1231 = vpop.f32.mrb[0].mxu0
      %1232 = vdwg.mxu0
      %v1233 = vadd.f32 %v1155, %v1227
      %v1234 = vadd.f32 %v1156, %v1229
      %1235 = vrot.lane.b32.xlu0 %v633, 111
      %v1236 = vpop.permute.xlu0 %1235
      %1237 = vrot.lane.b32.xlu0 %v634, 111
      %v1238 = vpop.permute.xlu0 %1237
      %vm1239 = vcmp.lt.s32.totalorder %v640, 111
      %v1240 = vsel %vm1239, %v1236, %v1238
      %v1241 = vsel %vm1239, %v1238, %v1236
      %s1242 = scalar_lea.vmem %s2, 16
      %v1243 = vld [vmem:[%s1242] sm:$0x3]
      %v1245 = vlaneseq
      %v1246 = vshrl.u32 %v1245, 7
      %v1247 = vsub.s32 0, %v1246
      %v1248 = vrot.slane %v1243, %v1247
      %v1249 = vlaneseq
      %v1250 = vshrl.u32 %v1249, 7
      %v1251 = vsub.s32 1, %v1250
      %v1252 = vrot.slane %v1243, %v1251
      %v1255 = vmul.f32 %v1240, %v1248
      %v1256 = vmul.f32 %v1241, %v1252
      %s1257 = scalar_lea.vmem %s6, 16
      %v1258 = vld [vmem:[%s1257] sm:$0x3]
      %v1259 = vpack.c.bf16 %v1255, %v1255
      %v1260 = vpack.c.bf16 %v1256, %v1256
      %v1262 = vsel %vm687, %v1258, 0
      %v1265 = vsel %vm691, %v1259, 0
      %v1268 = vsel %vm691, %v1260, 0
      %1270 = vmatprep.subr.bf16.mxu0 %v1268
      %1271 = vmatpush1.bf16.msra.mxu0 %v1265
      %1272 = vmatprep.subr.bf16.mxu0 0
      %1273 = vmatpush1.bf16.msra.mxu0 0
      %1274 = vmatprep.subr.bf16.mxu0 0
      %1275 = vmatpush1.bf16.msra.mxu0 0
      %1276 = vmatprep.subr.bf16.mxu0 0
      %1277 = vmatpush1.bf16.msra.mxu0 0
      %1278 = vmatprep.subr.bf16.mxu0 0
      %1279 = vmatpush1.bf16.msra.mxu0 0
      %1280 = vmatprep.subr.bf16.mxu0 0
      %1281 = vmatpush1.bf16.msra.mxu0 0
      %1282 = vmatprep.subr.bf16.mxu0 0
      %1283 = vmatpush1.bf16.msra.mxu0 0
      %1284 = vmatprep.subr.bf16.mxu0 0
      %1285 = vmatpush1.bf16.msra.mxu0 0
      %1286 = vmatprep.subr.bf16.mxu0 0
      %1287 = vmatpush1.bf16.msra.mxu0 0
      %1288 = vmatprep.subr.bf16.mxu0 0
      %1289 = vmatpush1.bf16.msra.mxu0 0
      %1290 = vmatprep.subr.bf16.mxu0 0
      %1291 = vmatpush1.bf16.msra.mxu0 0
      %1292 = vmatprep.subr.bf16.mxu0 0
      %1293 = vmatpush1.bf16.msra.mxu0 0
      %1294 = vmatprep.subr.bf16.mxu0 0
      %1295 = vmatpush1.bf16.msra.mxu0 0
      %1296 = vmatprep.subr.bf16.mxu0 0
      %1297 = vmatpush1.bf16.msra.mxu0 0
      %1298 = vmatprep.subr.bf16.mxu0 0
      %1299 = vmatpush1.bf16.msra.mxu0 0
      %1300 = vmatprep.subr.bf16.mxu0 0
      %1301 = vmatpush1.bf16.msra.mxu0 0
      %1302 = vmatprep.mubr.bf16.mxu0 0
      %1303 = vmatmul.mubr.bf16.gmra.mrb[0].mxu0 %v1262
      %v1304 = vpop.f32.mrb[0].mxu0
      %v1305 = vadd.f32 0.0, %v1304
      %v1306 = vpop.f32.mrb[0].mxu0
      %v1307 = vadd.f32 0.0, %v1306
      %v1308 = vpop.f32.mrb[0].mxu0
      %v1309 = vpop.f32.mrb[0].mxu0
      %1310 = vdwg.mxu0
      %v1311 = vadd.f32 %v1233, %v1305
      %v1312 = vadd.f32 %v1234, %v1307
      %v1313 = vld [vmem:[%s7] sm:$0xf]
      %1315 = vset.pattern.permute.xlu0 0
      %1316 = vperm.xlu0 %1315, %v1313
      %v1317 = vpop.permute.xlu0 %1316
      %v1319 = vmul.f32 %v1311, %v1317
      %v1320 = vmul.f32 %v1312, %v1317
      %v1321 = vld [vmem:[%s8] sm:$0xf]
      %1323 = vset.pattern.permute.xlu0 0
      %1324 = vperm.xlu0 %1323, %v1321
      %v1325 = vpop.permute.xlu0 %1324
      %v1327 = vadd.f32 %v1319, %v1325
      %v1328 = vadd.f32 %v1320, %v1325
      %v1329 = vmax.f32 %v1327, 0.0
      %v1330 = vmax.f32 %v1328, 0.0
      %v1331 = vmin.f32 %v1329, 1.0
      %v1332 = vmin.f32 %v1330, 1.0
      %v1333 = vmul.f32 %v1331, 15.0
      %v1334 = vmul.f32 %v1332, 15.0
      %v1335 = vround.ne.pseudo %v1333
      %v1336 = vround.ne.pseudo %v1334
      %v1337 = vmul.f32 %v1335, %v632
      %v1338 = vmul.f32 %v1336, %v632
      %v1339 = vld [vmem:[%s9] sm:$0xf]
      %v1340 = vld [vmem:[%s9 + $0x4] sm:$0xf]
      %v1341 = vpack.c.bf16 %v1337, %v1337
      %v1342 = vpack.c.bf16 %v1338, %v1338
      %v1345 = vunpack.c.l.b16 %v1339
      %v1346 = vunpack.c.l.b16 %v1340
      %v1347 = vpack.c.b16 %v1346, %v1345
      %v1349 = vsel %vm687, %v1347, 0
      %v1352 = vsel %vm691, %v1341, 0
      %v1355 = vsel %vm691, %v1342, 0
      %1357 = vmatprep.subr.bf16.mxu0 %v1355
      %1358 = vmatpush1.bf16.msra.mxu0 %v1352
      %1359 = vmatprep.subr.bf16.mxu0 0
      %1360 = vmatpush1.bf16.msra.mxu0 0
      %1361 = vmatprep.subr.bf16.mxu0 0
      %1362 = vmatpush1.bf16.msra.mxu0 0
      %1363 = vmatprep.subr.bf16.mxu0 0
      %1364 = vmatpush1.bf16.msra.mxu0 0
      %1365 = vmatprep.subr.bf16.mxu0 0
      %1366 = vmatpush1.bf16.msra.mxu0 0
      %1367 = vmatprep.subr.bf16.mxu0 0
      %1368 = vmatpush1.bf16.msra.mxu0 0
      %1369 = vmatprep.subr.bf16.mxu0 0
      %1370 = vmatpush1.bf16.msra.mxu0 0
      %1371 = vmatprep.subr.bf16.mxu0 0
      %1372 = vmatpush1.bf16.msra.mxu0 0
      %1373 = vmatprep.subr.bf16.mxu0 0
      %1374 = vmatpush1.bf16.msra.mxu0 0
      %1375 = vmatprep.subr.bf16.mxu0 0
      %1376 = vmatpush1.bf16.msra.mxu0 0
      %1377 = vmatprep.subr.bf16.mxu0 0
      %1378 = vmatpush1.bf16.msra.mxu0 0
      %1379 = vmatprep.subr.bf16.mxu0 0
      %1380 = vmatpush1.bf16.msra.mxu0 0
      %1381 = vmatprep.subr.bf16.mxu0 0
      %1382 = vmatpush1.bf16.msra.mxu0 0
      %1383 = vmatprep.subr.bf16.mxu0 0
      %1384 = vmatpush1.bf16.msra.mxu0 0
      %1385 = vmatprep.subr.bf16.mxu0 0
      %1386 = vmatpush1.bf16.msra.mxu0 0
      %1387 = vmatprep.subr.bf16.mxu0 0
      %1388 = vmatpush1.bf16.msra.mxu0 0
      %1389 = vmatprep.mubr.bf16.mxu0 0
      %1390 = vmatmul.mubr.bf16.gmra.mrb[0].mxu0 %v1349
      %v1391 = vpop.f32.mrb[0].mxu0
      %v1392 = vadd.f32 0.0, %v1391
      %v1393 = vpop.f32.mrb[0].mxu0
      %v1394 = vadd.f32 0.0, %v1393
      %v1395 = vpop.f32.mrb[0].mxu0
      %v1396 = vadd.f32 0.0, %v1395
      %v1397 = vpop.f32.mrb[0].mxu0
      %v1398 = vadd.f32 0.0, %v1397
      %1399 = vdwg.mxu0
      %v1400 = vld [vmem:[%s10] sm:$0xff]
      %v1401 = vld [vmem:[%s10 + $0x8] sm:$0xff]
      %1403 = vset.pattern.permute.xlu0 0
      %1404 = vperm.xlu0 %1403, %v1400
      %v1405 = vpop.permute.xlu0 %1404
      %1408 = vset.pattern.permute.xlu0 0
      %1409 = vperm.xlu0 %1408, %v1401
      %v1410 = vpop.permute.xlu0 %1409
      %v1412 = vmul.f32 %v1392, %v1405
      %v1413 = vmul.f32 %v1394, %v1405
      %v1414 = vmul.f32 %v1396, %v1410
      %v1415 = vmul.f32 %v1398, %v1410
      %v1416 = vld [vmem:[%s11] sm:$0xff]
      %v1417 = vld [vmem:[%s11 + $0x8] sm:$0xff]
      %1419 = vset.pattern.permute.xlu0 0
      %1420 = vperm.xlu0 %1419, %v1416
      %v1421 = vpop.permute.xlu0 %1420
      %1424 = vset.pattern.permute.xlu0 0
      %1425 = vperm.xlu0 %1424, %v1417
      %v1426 = vpop.permute.xlu0 %1425
      %v1428 = vadd.f32 %v1412, %v1421
      %v1429 = vadd.f32 %v1413, %v1421
      %v1430 = vadd.f32 %v1414, %v1426
      %v1431 = vadd.f32 %v1415, %v1426
      %v1432 = vadd.f32 %v1428, %v556
      %v1433 = vadd.f32 %v1429, %v557
      %v1434 = vadd.f32 %v1430, %v558
      %v1435 = vadd.f32 %v1431, %v559
      %v1436 = vld [vmem:[%s12] sm:$0xf]
      %v1437 = vld [vmem:[%s12 + $0x4] sm:$0xf]
      %v1438 = vpack.c.bf16 %v1434, %v1432
      %v1439 = vpack.c.bf16 %v1435, %v1433
      %v1442 = vunpack.c.l.b16 %v1436
      %v1443 = vunpack.c.l.b16 %v1437
      %v1444 = vpack.c.b16 %v1443, %v1442
      %v1446 = vsel %vm563, %v1444, 0
      %1448 = vmatprep.subr.bf16.mxu0 %v1439
      %1449 = vmatpush1.bf16.msra.mxu0 %v1438
      %1450 = vmatprep.subr.bf16.mxu0 0
      %1451 = vmatpush1.bf16.msra.mxu0 0
      %1452 = vmatprep.subr.bf16.mxu0 0
      %1453 = vmatpush1.bf16.msra.mxu0 0
      %1454 = vmatprep.subr.bf16.mxu0 0
      %1455 = vmatpush1.bf16.msra.mxu0 0
      %1456 = vmatprep.subr.bf16.mxu0 0
      %1457 = vmatpush1.bf16.msra.mxu0 0
      %1458 = vmatprep.subr.bf16.mxu0 0
      %1459 = vmatpush1.bf16.msra.mxu0 0
      %1460 = vmatprep.subr.bf16.mxu0 0
      %1461 = vmatpush1.bf16.msra.mxu0 0
      %1462 = vmatprep.subr.bf16.mxu0 0
      %1463 = vmatpush1.bf16.msra.mxu0 0
      %1464 = vmatprep.subr.bf16.mxu0 0
      %1465 = vmatpush1.bf16.msra.mxu0 0
      %1466 = vmatprep.subr.bf16.mxu0 0
      %1467 = vmatpush1.bf16.msra.mxu0 0
      %1468 = vmatprep.subr.bf16.mxu0 0
      %1469 = vmatpush1.bf16.msra.mxu0 0
      %1470 = vmatprep.subr.bf16.mxu0 0
      %1471 = vmatpush1.bf16.msra.mxu0 0
      %1472 = vmatprep.subr.bf16.mxu0 0
      %1473 = vmatpush1.bf16.msra.mxu0 0
      %1474 = vmatprep.subr.bf16.mxu0 0
      %1475 = vmatpush1.bf16.msra.mxu0 0
      %1476 = vmatprep.subr.bf16.mxu0 0
      %1477 = vmatpush1.bf16.msra.mxu0 0
      %1478 = vmatprep.subr.bf16.mxu0 0
      %1479 = vmatpush1.bf16.msra.mxu0 0
      %1480 = vmatprep.mubr.bf16.mxu0 0
      %1481 = vmatmul.mubr.bf16.gmra.mrb[0].mxu0 %v1446
      %v1482 = vpop.f32.mrb[0].mxu0
      %v1483 = vadd.f32 0.0, %v1482
      %v1484 = vpop.f32.mrb[0].mxu0
      %v1485 = vadd.f32 0.0, %v1484
      %v1486 = vpop.f32.mrb[0].mxu0
      %v1487 = vadd.f32 0.0, %v1486
      %v1488 = vpop.f32.mrb[0].mxu0
      %v1489 = vadd.f32 0.0, %v1488
      %1490 = vdwg.mxu0
      %v1491 = vld [vmem:[%s13] sm:$0xff]
      %v1492 = vld [vmem:[%s13 + $0x8] sm:$0xff]
      %1494 = vset.pattern.permute.xlu0 0
      %1495 = vperm.xlu0 %1494, %v1491
      %v1496 = vpop.permute.xlu0 %1495
      %1499 = vset.pattern.permute.xlu0 0
      %1500 = vperm.xlu0 %1499, %v1492
      %v1501 = vpop.permute.xlu0 %1500
      %v1503 = vmul.f32 %v1483, %v1496
      %v1504 = vmul.f32 %v1485, %v1496
      %v1505 = vmul.f32 %v1487, %v1501
      %v1506 = vmul.f32 %v1489, %v1501
      %v1507 = vld [vmem:[%s14] sm:$0xff]
      %v1508 = vld [vmem:[%s14 + $0x8] sm:$0xff]
      %1510 = vset.pattern.permute.xlu0 0
      %1511 = vperm.xlu0 %1510, %v1507
      %v1512 = vpop.permute.xlu0 %1511
      %1515 = vset.pattern.permute.xlu0 0
      %1516 = vperm.xlu0 %1515, %v1508
      %v1517 = vpop.permute.xlu0 %1516
      %v1519 = vadd.f32 %v1503, %v1512
      %v1520 = vadd.f32 %v1504, %v1512
      %v1521 = vadd.f32 %v1505, %v1517
      %v1522 = vadd.f32 %v1506, %v1517
      %v1523 = vld [vmem:[%s544] sm:$0xff]
      %v1524 = vld [vmem:[%s544 + $0x8] sm:$0xff]
      %v1525 = vld [vmem:[%s544 + $0x10] sm:$0xff]
      %v1526 = vld [vmem:[%s544 + $0x18] sm:$0xff]
      %v1527 = vadd.f32 %v1523, %v1519
      %v1528 = vadd.f32 %v1524, %v1520
      %v1529 = vadd.f32 %v1525, %v1521
      %v1530 = vadd.f32 %v1526, %v1522
      %v1531 = vmax.f32 %v1527, 0.0
      %v1532 = vmax.f32 %v1528, 0.0
      %v1533 = vmax.f32 %v1529, 0.0
      %v1534 = vmax.f32 %v1530, 0.0
      %1535 = vst [vmem:[%s554] sm:$0xff] %v1531
      %1536 = vst [vmem:[%s554 + $0x8] sm:$0xff] %v1532
      %1537 = vst [vmem:[%s554 + $0x10] sm:$0xff] %v1533
      %1538 = vst [vmem:[%s554 + $0x18] sm:$0xff] %v1534
      %v1539 = vmax.f32 %v1432, 0.0
      %v1540 = vmax.f32 %v1433, 0.0
      %v1541 = vmax.f32 %v1434, 0.0
      %v1542 = vmax.f32 %v1435, 0.0
      %v1543 = vmin.f32 %v1539, 1.0
      %v1544 = vmin.f32 %v1540, 1.0
      %v1545 = vmin.f32 %v1541, 1.0
      %v1546 = vmin.f32 %v1542, 1.0
      %v1547 = vmul.f32 %v1543, 15.0
      %v1548 = vmul.f32 %v1544, 15.0
      %v1549 = vmul.f32 %v1545, 15.0
      %v1550 = vmul.f32 %v1546, 15.0
      %v1551 = vround.ne.pseudo %v1547
      %v1552 = vround.ne.pseudo %v1548
      %v1553 = vround.ne.pseudo %v1549
      %v1554 = vround.ne.pseudo %v1550
      %v1555 = vmul.f32 %v1551, %v632
      %v1556 = vmul.f32 %v1552, %v632
      %v1557 = vmul.f32 %v1553, %v632
      %v1558 = vmul.f32 %v1554, %v632
      %1559 = vst [vmem:[%s549] sm:$0xff] %v1555
      %1560 = vst [vmem:[%s549 + $0x8] sm:$0xff] %v1556
      %1561 = vst [vmem:[%s549 + $0x10] sm:$0xff] %v1557
      %1562 = vst [vmem:[%s549 + $0x18] sm:$0xff] %v1558
      %p1563 = scmp.lt.s32.totalorder %s28, 1
      %s1564 = scalar_select %p1563, %s28, 1
      %s1565 = smul.addr %s1564, 4
      %s1566 = smul.addr %s1565, 8
      %s1567 = scalar_lea.vmem %s15, %s1566
      %p1568 = scmp.lt.s32.totalorder %s28, 1
      %s1569 = scalar_select %p1568, %s28, 1
      %s1570 = smul.addr %s1569, 4
      %s1571 = smul.addr %s1570, 8
      %s1572 = scalar_lea.vmem %s16, %s1571
      // Predicated region
      $region81: #{bottleneck_forward.1} parent=79 // pred_check
        %p1573 = pneg %p371
      $region82: #{bottleneck_forward.1} parent=79 // pred_check_branch
        %1575 = sbr.rel (%p1573) target = $region84
      $region83: #{bottleneck_forward.1} parent=79 // pred_region
        _
      $region84: #{bottleneck_forward.1} parent=79 // pred_fallthru
        _
      // Predicated region
      $region85: #{bottleneck_forward.1} parent=79 // pred_check
        %p1576 = pneg %p397
      $region86: #{bottleneck_forward.1} parent=79 // pred_check_branch
        %1578 = sbr.rel (%p1576) target = $region88
      $region87: #{bottleneck_forward.1} parent=79 // pred_region
        _
      $region88: #{bottleneck_forward.1} parent=79 // pred_fallthru
        _
    $region80: #{bottleneck_forward.1} parent=5 // pred_fallthru
      _
    %p1579 = scmp.le.s32.totalorder 2, %s23
    // Predicated region
    $region89: #{bottleneck_forward.1} parent=5 // pred_check
      %p1580 = pneg %p1579
    $region90: #{bottleneck_forward.1} parent=5 // pred_check_branch
      %1582 = sbr.rel (%p1580) target = $region92
    $region91: #{bottleneck_forward.1} parent=5 // pred_region
      %s1583 = ssub.s32 %s23, 2
      // Predicated region
      $region93: #{bottleneck_forward.1} parent=91 // pred_check
        %p1584 = pneg %p377
      $region94: #{bottleneck_forward.1} parent=91 // pred_check_branch
        %1586 = sbr.rel (%p1584) target = $region96
      $region95: #{bottleneck_forward.1} parent=91 // pred_region
        %p1587 = scmp.lt.s32.totalorder %s29, 1
        %s1588 = scalar_select %p1587, %s29, 1
        %s1589 = smul.addr %s1588, 4
        %s1590 = smul.addr %s1589, 8
        %s1591 = scalar_lea.vmem %s15, %s1590
      $region96: #{bottleneck_forward.1} parent=91 // pred_fallthru
        _
      // Predicated region
      $region97: #{bottleneck_forward.1} parent=91 // pred_check
        %p1592 = pneg %p403
      $region98: #{bottleneck_forward.1} parent=91 // pred_check_branch
        %1594 = sbr.rel (%p1592) target = $region100
      $region99: #{bottleneck_forward.1} parent=91 // pred_region
        %p1595 = scmp.lt.s32.totalorder %s29, 1
        %s1596 = scalar_select %p1595, %s29, 1
        %s1597 = smul.addr %s1596, 4
        %s1598 = smul.addr %s1597, 8
        %s1599 = scalar_lea.vmem %s16, %s1598
      $region100: #{bottleneck_forward.1} parent=91 // pred_fallthru
        _
    $region92: #{bottleneck_forward.1} parent=5 // pred_fallthru
      _
  $region6: #{bottleneck_forward.1} parent=0 // loop_footer
    %s27 = sadd.s32 1, %s23
  $region7: #{bottleneck_forward.1} parent=0 // loop_footer_branch
    %22 = sbr.rel target = $region3
  $region8: #{bottleneck_forward.1} parent=0 // loop_exit
    _

</llo_original>
